<compile_context>
chip_gen: v6e
topology: v6e:2x2x1
jax: 0.10.0
libtpu: 0.0.40
codegen_flags: <defaults>
</compile_context>

<pallas_src>
import functools

import jax
import jax.numpy as jnp
from jax.experimental import pallas as pl
from jax.experimental.pallas import tpu as pltpu

IN_FEATURES = 18 * 12 * 3  # 648
TILE_B_MAX = 1024          # rows per grid step (amortizes ~0.35us/step overhead)


def _cdiv(a, b):
    return (a + b - 1) // b


def _round_up(x, m):
    return ((x + m - 1) // m) * m


def _choose_tile(batch, tile_max=TILE_B_MAX, mult=16):
    """Balanced batch tile: multiple of `mult`, >=2 steps for large batches."""
    if batch <= mult:
        return _round_up(max(batch, 1), 8)
    # Keep >= 2 grid steps so "parallel" batch axis can use both v7x TCs.
    n_steps = max(_cdiv(batch, tile_max), 2)
    return _round_up(_cdiv(batch, n_steps), mult)


def _mlp_kernel_deep(x_ref, w1_ref, b1_ref, w2_ref, b2_ref,
                     w3_ref, b3_ref, wo_ref, bo_ref, o_ref):
    """last_layer > 1 path: 648 -> 512 -> 256 -> 128 -> 1."""
    # f32 tile from HBM, cast to bf16 in-register (VPU) for the MXU.
    x = x_ref[...].astype(jnp.bfloat16)                          # (tb, 648)
    h = jnp.dot(x, w1_ref[...], preferred_element_type=jnp.float32) + b1_ref[...]
    h = jnp.maximum(h, 0.0)
    # TODO(synk): nn.Dropout is identity in eval mode; training-mode stochastic
    # dropout (pltpu.prng_*) is not implemented here.
    h = jnp.dot(h.astype(jnp.bfloat16), w2_ref[...],
                preferred_element_type=jnp.float32) + b2_ref[...]
    h = jnp.maximum(h, 0.0)
    h = jnp.dot(h.astype(jnp.bfloat16), w3_ref[...],
                preferred_element_type=jnp.float32) + b3_ref[...]
    h = jnp.maximum(h, 0.0)
    # Final 128->1 layer on VPU (mul) + XLU (lane reduce) instead of an N=1 MXU matmul.
    z = jnp.sum(h * wo_ref[...], axis=-1, keepdims=True) + bo_ref[...]
    z = jnp.maximum(z, 0.0)          # ReLU before sigmoid, as in the PyTorch forward
    o_ref[...] = jax.nn.sigmoid(z).astype(o_ref.dtype)


def _mlp_kernel_shallow(x_ref, w1_ref, b1_ref, w2_ref, b2_ref,
                        wo_ref, bo_ref, o_ref):
    """last_layer <= 1 path: 648 -> 512 -> 256 -> 1."""
    x = x_ref[...].astype(jnp.bfloat16)
    h = jnp.dot(x, w1_ref[...], preferred_element_type=jnp.float32) + b1_ref[...]
    h = jnp.maximum(h, 0.0)
    # TODO(synk): dropout treated as identity (eval mode).
    h = jnp.dot(h.astype(jnp.bfloat16), w2_ref[...],
                preferred_element_type=jnp.float32) + b2_ref[...]
    h = jnp.maximum(h, 0.0)
    z = jnp.sum(h * wo_ref[...], axis=-1, keepdims=True) + bo_ref[...]
    z = jnp.maximum(z, 0.0)
    o_ref[...] = jax.nn.sigmoid(z).astype(o_ref.dtype)


def init_params(key, last_layer):
    """Deterministic parameter init mimicking nn.Linear's U(-1/sqrt(fan_in), ...)."""
    def linear(key, fan_in, fan_out):
        kw, kb = jax.random.split(key)
        bound = 1.0 / jnp.sqrt(fan_in)
        w = jax.random.uniform(kw, (fan_in, fan_out), jnp.float32, -bound, bound)
        b = jax.random.uniform(kb, (1, fan_out), jnp.float32, -bound, bound)
        return w, b

    k1, k2, k3, k4, k5 = jax.random.split(key, 5)
    return {
        "linear_1": linear(k1, IN_FEATURES, 512),
        "linear_2": linear(k2, 512, 256),
        "linear_3": linear(k3, 256, 128),
        "linear_out": linear(k4, 256, 1),
        "linear_out_2": linear(k5, 128, 1),
    }


@functools.partial(jax.jit, static_argnames=("last_layer",))
def mlp_forward(x, params, *, last_layer):
    """x: (B, 18, 12, 3) float32 -> (B, 1) float32."""
    B = x.shape[0]
    # nn.Flatten(): metadata-only reshape; NO pad / NO dtype cast in the wrapper.
    x_flat = x.reshape(B, -1)

    tile_b = _choose_tile(B)
    b_pad = _round_up(B, tile_b)
    if b_pad != B:
        # Only copies x when B isn't a tile multiple; padded rows are discarded.
        x_flat = jnp.pad(x_flat, ((0, b_pad - B), (0, 0)))

    w1, b1 = params["linear_1"]
    w2, b2 = params["linear_2"]
    w1b = w1.astype(jnp.bfloat16)                    # (648, 512), K kept unpadded
    w2b = w2.astype(jnp.bfloat16)

    const = lambda i: (0, 0)   # weights/biases: one resident VMEM block for all steps

    if last_layer > 1:
        w3, b3 = params["linear_3"]
        wo, bo = params["linear_out_2"]
        w3b = w3.astype(jnp.bfloat16)
        wo_row = wo.reshape(1, -1).astype(jnp.float32)          # (1, 128)
        args = (x_flat, w1b, b1, w2b, b2, w3b, b3, wo_row, bo)
        kernel = _mlp_kernel_deep
        in_specs = [
            pl.BlockSpec((tile_b, IN_FEATURES), lambda i: (i, 0)),
            pl.BlockSpec((IN_FEATURES, 512), const),
            pl.BlockSpec((1, 512), const),
            pl.BlockSpec((512, 256), const),
            pl.BlockSpec((1, 256), const),
            pl.BlockSpec((256, 128), const),
            pl.BlockSpec((1, 128), const),
            pl.BlockSpec((1, 128), const),
            pl.BlockSpec((1, 1), const),
        ]
    else:
        wo, bo = params["linear_out"]
        wo_row = wo.reshape(1, -1).astype(jnp.float32)          # (1, 256)
        args = (x_flat, w1b, b1, w2b, b2, wo_row, bo)
        kernel = _mlp_kernel_shallow
        in_specs = [
            pl.BlockSpec((tile_b, IN_FEATURES), lambda i: (i, 0)),
            pl.BlockSpec((IN_FEATURES, 512), const),
            pl.BlockSpec((1, 512), const),
            pl.BlockSpec((512, 256), const),
            pl.BlockSpec((1, 256), const),
            pl.BlockSpec((1, 256), const),
            pl.BlockSpec((1, 1), const),
        ]

    out = pl.pallas_call(
        kernel,
        out_shape=jax.ShapeDtypeStruct((b_pad, 1), jnp.float32),
        grid=(b_pad // tile_b,),
        in_specs=in_specs,
        out_specs=pl.BlockSpec((tile_b, 1), lambda i: (i, 0)),
        compiler_params=pltpu.CompilerParams(
            dimension_semantics=("parallel",),       # shard batch steps across TCs (v7x)
            vmem_limit_bytes=32 * 1024 * 1024),      # headroom for 1024-row f32 x tiles on v5e
    )(*args)
    return out[:B]


def mlp_reference(x, params, *, last_layer):
    """Pure-JAX reference mirroring the kernel's bf16-weights / f32-accum math."""
    B = x.shape[0]
    h = x.reshape(B, -1).astype(jnp.bfloat16)
    w1, b1 = params["linear_1"]
    w2, b2 = params["linear_2"]
    h = jnp.maximum(jnp.dot(h, w1.astype(jnp.bfloat16),
                            preferred_element_type=jnp.float32) + b1, 0.0)
    h = jnp.maximum(jnp.dot(h.astype(jnp.bfloat16), w2.astype(jnp.bfloat16),
                            preferred_element_type=jnp.float32) + b2, 0.0)
    if last_layer > 1:
        w3, b3 = params["linear_3"]
        wo, bo = params["linear_out_2"]
        h = jnp.maximum(jnp.dot(h.astype(jnp.bfloat16), w3.astype(jnp.bfloat16),
                                preferred_element_type=jnp.float32) + b3, 0.0)
        h = jnp.maximum(jnp.sum(h * wo.reshape(1, -1), axis=-1, keepdims=True) + bo, 0.0)
    else:
        wo, bo = params["linear_out"]
        h = jnp.maximum(jnp.sum(h * wo.reshape(1, -1), axis=-1, keepdims=True) + bo, 0.0)
    return jax.nn.sigmoid(h)


if __name__ == "__main__":
    key = jax.random.PRNGKey(0)
    kx, kp = jax.random.split(key)

    B = 8
    x = jax.random.normal(kx, (B, 18, 12, 3), jnp.float32)
    params = init_params(kp, last_layer=2)

    ok = True
    for last_layer in (1, 2):
        out = mlp_forward(x, params, last_layer=last_layer)
        out = jax.block_until_ready(out)
        ref = mlp_reference(x, params, last_layer=last_layer)
        if out.shape != (B, 1):
            ok = False
        if not jnp.allclose(out, ref, atol=1e-4, rtol=1e-4):
            ok = False

    if ok:
        print("KERNEL_OK")
    else:
        print("KERNEL_MISMATCH")
</pallas_src>

<mosaic_0001>
module attributes {stable_mosaic.version = 11 : i64} {
  func.func @_mlp_kernel_shallow(%arg0: i32, %arg1: memref<8x648xf32, #tpu.memory_space<vmem>>, %arg2: memref<648x512xbf16, #tpu.memory_space<vmem>>, %arg3: memref<1x512xf32, #tpu.memory_space<vmem>>, %arg4: memref<512x256xbf16, #tpu.memory_space<vmem>>, %arg5: memref<1x256xf32, #tpu.memory_space<vmem>>, %arg6: memref<1x256xf32, #tpu.memory_space<vmem>>, %arg7: memref<1x1xf32, #tpu.memory_space<vmem>>, %arg8: memref<8x1xf32, #tpu.memory_space<vmem>>) attributes {dimension_semantics = [#tpu.dimension_semantics<parallel>], iteration_bounds = array<i64: 1>, scalar_prefetch = 0 : i64, scratch_operands = 0 : i64, tpu.core_type = #tpu.core_type<tc>, window_params = [{transform_indices = @transform_0, window_bounds = array<i64: 8, 648>}, {pipeline_mode = #tpu.pipeline_mode<synchronous>, transform_indices = @transform_1, window_bounds = array<i64: 648, 512>}, {pipeline_mode = #tpu.pipeline_mode<synchronous>, transform_indices = @transform_2, window_bounds = array<i64: 1, 512>}, {pipeline_mode = #tpu.pipeline_mode<synchronous>, transform_indices = @transform_3, window_bounds = array<i64: 512, 256>}, {pipeline_mode = #tpu.pipeline_mode<synchronous>, transform_indices = @transform_4, window_bounds = array<i64: 1, 256>}, {pipeline_mode = #tpu.pipeline_mode<synchronous>, transform_indices = @transform_5, window_bounds = array<i64: 1, 256>}, {pipeline_mode = #tpu.pipeline_mode<synchronous>, transform_indices = @transform_6, window_bounds = array<i64: 1, 1>}, {transform_indices = @transform_7, window_bounds = array<i64: 8, 1>}]} {
    %c0 = arith.constant 0 : index
    %c0_0 = arith.constant 0 : index
    %0 = vector.load %arg1[%c0, %c0_0] : memref<8x648xf32, #tpu.memory_space<vmem>>, vector<8x648xf32>
    %1 = arith.truncf %0 : vector<8x648xf32> to vector<8x648xbf16>
    %c0_1 = arith.constant 0 : index
    %c0_2 = arith.constant 0 : index
    %2 = vector.load %arg2[%c0_1, %c0_2] : memref<648x512xbf16, #tpu.memory_space<vmem>>, vector<648x512xbf16>
    %cst = arith.constant dense<0.000000e+00> : vector<8x512xf32>
    %3 = tpu.matmul %1, %2, %cst {dimension_numbers = #tpu.dot_dimension_numbers<[1], [0], [0], [1], [0, 0, 1, 1], [], []>} : vector<8x648xbf16>, vector<648x512xbf16>, vector<8x512xf32> -> vector<8x512xf32>
    %c0_3 = arith.constant 0 : index
    %c0_4 = arith.constant 0 : index
    %4 = vector.load %arg3[%c0_3, %c0_4] : memref<1x512xf32, #tpu.memory_space<vmem>>, vector<1x512xf32>
    %5 = vector.broadcast %4 : vector<1x512xf32> to vector<8x512xf32>
    %6 = arith.addf %3, %5 : vector<8x512xf32>
    %cst_5 = arith.constant 0.000000e+00 : f32
    %7 = vector.broadcast %cst_5 : f32 to vector<8x512xf32>
    %8 = arith.maximumf %6, %7 : vector<8x512xf32>
    %9 = arith.truncf %8 : vector<8x512xf32> to vector<8x512xbf16>
    %c0_6 = arith.constant 0 : index
    %c0_7 = arith.constant 0 : index
    %10 = vector.load %arg4[%c0_6, %c0_7] : memref<512x256xbf16, #tpu.memory_space<vmem>>, vector<512x256xbf16>
    %cst_8 = arith.constant dense<0.000000e+00> : vector<8x256xf32>
    %11 = tpu.matmul %9, %10, %cst_8 {dimension_numbers = #tpu.dot_dimension_numbers<[1], [0], [0], [1], [0, 0, 1, 1], [], []>} : vector<8x512xbf16>, vector<512x256xbf16>, vector<8x256xf32> -> vector<8x256xf32>
    %c0_9 = arith.constant 0 : index
    %c0_10 = arith.constant 0 : index
    %12 = vector.load %arg5[%c0_9, %c0_10] : memref<1x256xf32, #tpu.memory_space<vmem>>, vector<1x256xf32>
    %13 = vector.broadcast %12 : vector<1x256xf32> to vector<8x256xf32>
    %14 = arith.addf %11, %13 : vector<8x256xf32>
    %cst_11 = arith.constant 0.000000e+00 : f32
    %15 = vector.broadcast %cst_11 : f32 to vector<8x256xf32>
    %16 = arith.maximumf %14, %15 : vector<8x256xf32>
    %c0_12 = arith.constant 0 : index
    %c0_13 = arith.constant 0 : index
    %17 = vector.load %arg6[%c0_12, %c0_13] : memref<1x256xf32, #tpu.memory_space<vmem>>, vector<1x256xf32>
    %18 = vector.broadcast %17 : vector<1x256xf32> to vector<8x256xf32>
    %19 = arith.mulf %16, %18 : vector<8x256xf32>
    %cst_14 = arith.constant dense<0.000000e+00> : vector<8xf32>
    %20 = vector.multi_reduction <add>, %19, %cst_14 [1] : vector<8x256xf32> to vector<8xf32>
    %21 = vector.shape_cast %20 : vector<8xf32> to vector<8x1xf32>
    %c0_15 = arith.constant 0 : index
    %c0_16 = arith.constant 0 : index
    %22 = vector.load %arg7[%c0_15, %c0_16] : memref<1x1xf32, #tpu.memory_space<vmem>>, vector<1x1xf32>
    %23 = vector.broadcast %22 : vector<1x1xf32> to vector<8x1xf32>
    %24 = arith.addf %21, %23 : vector<8x1xf32>
    %cst_17 = arith.constant 0.000000e+00 : f32
    %25 = vector.broadcast %cst_17 : f32 to vector<8x1xf32>
    %26 = arith.maximumf %24, %25 : vector<8x1xf32>
    %27 = arith.negf %26 : vector<8x1xf32>
    %28 = math.exp %27 : vector<8x1xf32>
    %cst_18 = arith.constant 1.000000e+00 : f32
    %29 = vector.broadcast %cst_18 : f32 to vector<8x1xf32>
    %30 = arith.addf %29, %28 : vector<8x1xf32>
    %31 = arith.divf %29, %30 : vector<8x1xf32>
    %c0_19 = arith.constant 0 : index
    %c0_20 = arith.constant 0 : index
    %32 = vector.load %arg8[%c0_19, %c0_20] : memref<8x1xf32, #tpu.memory_space<vmem>>, vector<8x1xf32>
    tpu.vector_store %arg8[%c0_19, %c0_20], %31 {strides = array<i32>} : memref<8x1xf32, #tpu.memory_space<vmem>>, vector<8x1xf32>,
    return
  }
  func.func @transform_0(%arg0: i32) -> (i32, i32) {
    %c0_i32 = arith.constant 0 : i32
    %c0_i32_0 = arith.constant 0 : i32
    return %arg0, %c0_i32 : i32, i32
  }
  func.func @transform_1(%arg0: i32) -> (i32, i32) {
    %c0_i32 = arith.constant 0 : i32
    %c0_i32_0 = arith.constant 0 : i32
    %c0_i32_1 = arith.constant 0 : i32
    return %c0_i32, %c0_i32_0 : i32, i32
  }
  func.func @transform_2(%arg0: i32) -> (i32, i32) {
    %c0_i32 = arith.constant 0 : i32
    %c0_i32_0 = arith.constant 0 : i32
    %c0_i32_1 = arith.constant 0 : i32
    return %c0_i32, %c0_i32_0 : i32, i32
  }
  func.func @transform_3(%arg0: i32) -> (i32, i32) {
    %c0_i32 = arith.constant 0 : i32
    %c0_i32_0 = arith.constant 0 : i32
    %c0_i32_1 = arith.constant 0 : i32
    return %c0_i32, %c0_i32_0 : i32, i32
  }
  func.func @transform_4(%arg0: i32) -> (i32, i32) {
    %c0_i32 = arith.constant 0 : i32
    %c0_i32_0 = arith.constant 0 : i32
    %c0_i32_1 = arith.constant 0 : i32
    return %c0_i32, %c0_i32_0 : i32, i32
  }
  func.func @transform_5(%arg0: i32) -> (i32, i32) {
    %c0_i32 = arith.constant 0 : i32
    %c0_i32_0 = arith.constant 0 : i32
    %c0_i32_1 = arith.constant 0 : i32
    return %c0_i32, %c0_i32_0 : i32, i32
  }
  func.func @transform_6(%arg0: i32) -> (i32, i32) {
    %c0_i32 = arith.constant 0 : i32
    %c0_i32_0 = arith.constant 0 : i32
    %c0_i32_1 = arith.constant 0 : i32
    return %c0_i32, %c0_i32_0 : i32, i32
  }
  func.func @transform_7(%arg0: i32) -> (i32, i32) {
    %c0_i32 = arith.constant 0 : i32
    %c0_i32_0 = arith.constant 0 : i32
    return %arg0, %c0_i32 : i32, i32
  }
}

</mosaic_0001>

<llo_original>
// kernel: mlp_forward.1
$region0: #{mlp_forward.1}
  #allocation0 [shape = 'u32[]', space=smem, size = 0x4, offset = 0x4, fixed_abs, tag = 'smem constant byte address 0x4 - core index']
  #allocation1 [shape = 'u32[144,128]{1,0:T(1,128)}', space=vmem, size = 0x12000, scoped, tag = 'internal scratch']
  #allocation2 [shape = 'f32[1,1]{1,0:T(1,128)S(1)}', space=vmem, size = 0x200, scoped, tag = 'scoped memory for mlp_forward.1']
  %s0 = inlined_call_operand.vmem [shape: f32[8,648], index: 0, kind: input, shape index: {}]
  %s1 = inlined_call_operand.vmem [shape: bf16[648,512], index: 1, kind: input, shape index: {}]
  %s2 = inlined_call_operand.vmem [shape: f32[1,512], index: 2, kind: input, shape index: {}]
  %s3 = inlined_call_operand.vmem [shape: bf16[512,256], index: 3, kind: input, shape index: {}]
  %s4 = inlined_call_operand.vmem [shape: f32[1,256], index: 4, kind: input, shape index: {}]
  %s5 = inlined_call_operand.vmem [shape: f32[1,256], index: 5, kind: input, shape index: {}]
  %s6 = inlined_call_operand.<no memory space> [shape: f32[1,1], index: 6, kind: input, shape index: {}]
  %s7 = inlined_call_operand.vmem [shape: f32[8,1], index: 7, kind: output, shape index: {}]
  %s8 = sld [smem:[#allocation0]]
  $region38: #{mlp_forward.1} parent=0
    _
  %s10 = ssub.s32 1, %s8
  %s11 = scalar_select 0, %s10, %s8
  %v12 = vstv %s6
  %13 = vst [vmem:[#allocation2] sm:$0x1] %v12
  // Predicated region
  $region2: #{mlp_forward.1} parent=0 // pred_check
    _
  $region3: #{mlp_forward.1} parent=0 // pred_check_branch
    %15 = sbr.rel (0) target = $region5
  $region4: #{mlp_forward.1} parent=0 // pred_region
    _
  $region5: #{mlp_forward.1} parent=0 // pred_fallthru
    _
  // Predicated region
  $region6: #{mlp_forward.1} parent=0 // pred_check
    _
  $region7: #{mlp_forward.1} parent=0 // pred_check_branch
    %17 = sbr.rel (0) target = $region9
  $region8: #{mlp_forward.1} parent=0 // pred_region
    _
  $region9: #{mlp_forward.1} parent=0 // pred_fallthru
    _
  // Predicated region
  $region10: #{mlp_forward.1} parent=0 // pred_check
    _
  $region11: #{mlp_forward.1} parent=0 // pred_check_branch
    %19 = sbr.rel (0) target = $region13
  $region12: #{mlp_forward.1} parent=0 // pred_region
    _
  $region13: #{mlp_forward.1} parent=0 // pred_fallthru
    _
  // Predicated region
  $region14: #{mlp_forward.1} parent=0 // pred_check
    _
  $region15: #{mlp_forward.1} parent=0 // pred_check_branch
    %21 = sbr.rel (0) target = $region17
  $region16: #{mlp_forward.1} parent=0 // pred_region
    _
  $region17: #{mlp_forward.1} parent=0 // pred_fallthru
    _
  // Predicated region
  $region18: #{mlp_forward.1} parent=0 // pred_check
    _
  $region19: #{mlp_forward.1} parent=0 // pred_check_branch
    %23 = sbr.rel (0) target = $region21
  $region20: #{mlp_forward.1} parent=0 // pred_region
    _
  $region21: #{mlp_forward.1} parent=0 // pred_fallthru
    _
  // Predicated region
  $region22: #{mlp_forward.1} parent=0 // pred_check
    _
  $region23: #{mlp_forward.1} parent=0 // pred_check_branch
    %25 = sbr.rel (0) target = $region25
  $region24: #{mlp_forward.1} parent=0 // pred_region
    _
  $region25: #{mlp_forward.1} parent=0 // pred_fallthru
    _
  // Predicated region
  $region26: #{mlp_forward.1} parent=0 // pred_check
    _
  $region27: #{mlp_forward.1} parent=0 // pred_check_branch
    %27 = sbr.rel (0) target = $region29
  $region28: #{mlp_forward.1} parent=0 // pred_region
    _
  $region29: #{mlp_forward.1} parent=0 // pred_fallthru
    _
  %v29 = vld [vmem:[%s0] sm:$0xff]
  %v30 = vld [vmem:[%s0 + $0x8] sm:$0xff]
  %v31 = vld [vmem:[%s0 + $0x10] sm:$0xff]
  %v32 = vld [vmem:[%s0 + $0x18] sm:$0xff]
  %v33 = vld [vmem:[%s0 + $0x20] sm:$0xff]
  %v34 = vld [vmem:[%s0 + $0x28] sm:$0xff]
  %v35 = vpack.c.bf16 %v29, %v29
  %v36 = vpack.c.bf16 %v30, %v30
  %v37 = vpack.c.bf16 %v31, %v31
  %v38 = vpack.c.bf16 %v32, %v32
  %v39 = vpack.c.bf16 %v33, %v33
  %v40 = vpack.c.bf16 %v34, %v34
  %v41 = vld [vmem:[%s1] sm:$0xff]
  %v42 = vld [vmem:[%s1 + $0x8] sm:$0xff]
  %v43 = vld [vmem:[%s1 + $0x10] sm:$0xff]
  %v44 = vld [vmem:[%s1 + $0x18] sm:$0xff]
  %v45 = vld [vmem:[%s1 + $0x20] sm:$0xff]
  %v46 = vld [vmem:[%s1 + $0x28] sm:$0xff]
  %v47 = vld [vmem:[%s1 + $0x30] sm:$0xff]
  %v48 = vld [vmem:[%s1 + $0x38] sm:$0xff]
  %v49 = vld [vmem:[%s1 + $0x40] sm:$0xff]
  %v50 = vld [vmem:[%s1 + $0x48] sm:$0xff]
  %v51 = vld [vmem:[%s1 + $0x50] sm:$0xff]
  %v52 = vld [vmem:[%s1 + $0x58] sm:$0xff]
  %v53 = vld [vmem:[%s1 + $0x60] sm:$0xff]
  %v54 = vld [vmem:[%s1 + $0x68] sm:$0xff]
  %v55 = vld [vmem:[%s1 + $0x70] sm:$0xff]
  %v56 = vld [vmem:[%s1 + $0x78] sm:$0xff]
  %v57 = vld [vmem:[%s1 + $0x80] sm:$0xff]
  %v58 = vld [vmem:[%s1 + $0x88] sm:$0xff]
  %v59 = vld [vmem:[%s1 + $0x90] sm:$0xff]
  %v60 = vld [vmem:[%s1 + $0x98] sm:$0xff]
  %v61 = vld [vmem:[%s1 + $0xa0] sm:$0xff]
  %v62 = vld [vmem:[%s1 + $0xa8] sm:$0xff]
  %v63 = vld [vmem:[%s1 + $0xb0] sm:$0xff]
  %v64 = vld [vmem:[%s1 + $0xb8] sm:$0xff]
  %v65 = vld [vmem:[%s1 + $0xc0] sm:$0xff]
  %v66 = vld [vmem:[%s1 + $0xc8] sm:$0xff]
  %v67 = vld [vmem:[%s1 + $0xd0] sm:$0xff]
  %v68 = vld [vmem:[%s1 + $0xd8] sm:$0xff]
  %v69 = vld [vmem:[%s1 + $0xe0] sm:$0xff]
  %v70 = vld [vmem:[%s1 + $0xe8] sm:$0xff]
  %v71 = vld [vmem:[%s1 + $0xf0] sm:$0xff]
  %v72 = vld [vmem:[%s1 + $0xf8] sm:$0xff]
  %v73 = vld [vmem:[%s1 + $0x100] sm:$0xff]
  %v74 = vld [vmem:[%s1 + $0x108] sm:$0xff]
  %v75 = vld [vmem:[%s1 + $0x110] sm:$0xff]
  %v76 = vld [vmem:[%s1 + $0x118] sm:$0xff]
  %v77 = vld [vmem:[%s1 + $0x120] sm:$0xff]
  %v78 = vld [vmem:[%s1 + $0x128] sm:$0xff]
  %v79 = vld [vmem:[%s1 + $0x130] sm:$0xff]
  %v80 = vld [vmem:[%s1 + $0x138] sm:$0xff]
  %v81 = vld [vmem:[%s1 + $0x140] sm:$0xff]
  %v82 = vld [vmem:[%s1 + $0x148] sm:$0xff]
  %v83 = vld [vmem:[%s1 + $0x150] sm:$0xff]
  %v84 = vld [vmem:[%s1 + $0x158] sm:$0xff]
  %v85 = vld [vmem:[%s1 + $0x160] sm:$0xff]
  %v86 = vld [vmem:[%s1 + $0x168] sm:$0xff]
  %v87 = vld [vmem:[%s1 + $0x170] sm:$0xff]
  %v88 = vld [vmem:[%s1 + $0x178] sm:$0xff]
  %v89 = vld [vmem:[%s1 + $0x180] sm:$0xff]
  %v90 = vld [vmem:[%s1 + $0x188] sm:$0xff]
  %v91 = vld [vmem:[%s1 + $0x190] sm:$0xff]
  %v92 = vld [vmem:[%s1 + $0x198] sm:$0xff]
  %v93 = vld [vmem:[%s1 + $0x1a0] sm:$0xff]
  %v94 = vld [vmem:[%s1 + $0x1a8] sm:$0xff]
  %v95 = vld [vmem:[%s1 + $0x1b0] sm:$0xff]
  %v96 = vld [vmem:[%s1 + $0x1b8] sm:$0xff]
  %v97 = vld [vmem:[%s1 + $0x1c0] sm:$0xff]
  %v98 = vld [vmem:[%s1 + $0x1c8] sm:$0xff]
  %v99 = vld [vmem:[%s1 + $0x1d0] sm:$0xff]
  %v100 = vld [vmem:[%s1 + $0x1d8] sm:$0xff]
  %v101 = vld [vmem:[%s1 + $0x1e0] sm:$0xff]
  %v102 = vld [vmem:[%s1 + $0x1e8] sm:$0xff]
  %v103 = vld [vmem:[%s1 + $0x1f0] sm:$0xff]
  %v104 = vld [vmem:[%s1 + $0x1f8] sm:$0xff]
  %v105 = vld [vmem:[%s1 + $0x200] sm:$0xff]
  %v106 = vld [vmem:[%s1 + $0x208] sm:$0xff]
  %v107 = vld [vmem:[%s1 + $0x210] sm:$0xff]
  %v108 = vld [vmem:[%s1 + $0x218] sm:$0xff]
  %v109 = vld [vmem:[%s1 + $0x220] sm:$0xff]
  %v110 = vld [vmem:[%s1 + $0x228] sm:$0xff]
  %v111 = vld [vmem:[%s1 + $0x230] sm:$0xff]
  %v112 = vld [vmem:[%s1 + $0x238] sm:$0xff]
  %v113 = vld [vmem:[%s1 + $0x240] sm:$0xff]
  %v114 = vld [vmem:[%s1 + $0x248] sm:$0xff]
  %v115 = vld [vmem:[%s1 + $0x250] sm:$0xff]
  %v116 = vld [vmem:[%s1 + $0x258] sm:$0xff]
  %v117 = vld [vmem:[%s1 + $0x260] sm:$0xff]
  %v118 = vld [vmem:[%s1 + $0x268] sm:$0xff]
  %v119 = vld [vmem:[%s1 + $0x270] sm:$0xff]
  %v120 = vld [vmem:[%s1 + $0x278] sm:$0xff]
  %v121 = vld [vmem:[%s1 + $0x280] sm:$0xff]
  %v122 = vld [vmem:[%s1 + $0x288] sm:$0xff]
  %v123 = vld [vmem:[%s1 + $0x290] sm:$0xff]
  %v124 = vld [vmem:[%s1 + $0x298] sm:$0xff]
  %v125 = vld [vmem:[%s1 + $0x2a0] sm:$0xff]
  %v126 = vld [vmem:[%s1 + $0x2a8] sm:$0xff]
  %v127 = vld [vmem:[%s1 + $0x2b0] sm:$0xff]
  %v128 = vld [vmem:[%s1 + $0x2b8] sm:$0xff]
  %v129 = vld [vmem:[%s1 + $0x2c0] sm:$0xff]
  %v130 = vld [vmem:[%s1 + $0x2c8] sm:$0xff]
  %v131 = vld [vmem:[%s1 + $0x2d0] sm:$0xff]
  %v132 = vld [vmem:[%s1 + $0x2d8] sm:$0xff]
  %v133 = vld [vmem:[%s1 + $0x2e0] sm:$0xff]
  %v134 = vld [vmem:[%s1 + $0x2e8] sm:$0xff]
  %v135 = vld [vmem:[%s1 + $0x2f0] sm:$0xff]
  %v136 = vld [vmem:[%s1 + $0x2f8] sm:$0xff]
  %v137 = vld [vmem:[%s1 + $0x300] sm:$0xff]
  %v138 = vld [vmem:[%s1 + $0x308] sm:$0xff]
  %v139 = vld [vmem:[%s1 + $0x310] sm:$0xff]
  %v140 = vld [vmem:[%s1 + $0x318] sm:$0xff]
  %v141 = vld [vmem:[%s1 + $0x320] sm:$0xff]
  %v142 = vld [vmem:[%s1 + $0x328] sm:$0xff]
  %v143 = vld [vmem:[%s1 + $0x330] sm:$0xff]
  %v144 = vld [vmem:[%s1 + $0x338] sm:$0xff]
  %v145 = vld [vmem:[%s1 + $0x340] sm:$0xff]
  %v146 = vld [vmem:[%s1 + $0x348] sm:$0xff]
  %v147 = vld [vmem:[%s1 + $0x350] sm:$0xff]
  %v148 = vld [vmem:[%s1 + $0x358] sm:$0xff]
  %v149 = vld [vmem:[%s1 + $0x360] sm:$0xff]
  %v150 = vld [vmem:[%s1 + $0x368] sm:$0xff]
  %v151 = vld [vmem:[%s1 + $0x370] sm:$0xff]
  %v152 = vld [vmem:[%s1 + $0x378] sm:$0xff]
  %v153 = vld [vmem:[%s1 + $0x380] sm:$0xff]
  %v154 = vld [vmem:[%s1 + $0x388] sm:$0xff]
  %v155 = vld [vmem:[%s1 + $0x390] sm:$0xff]
  %v156 = vld [vmem:[%s1 + $0x398] sm:$0xff]
  %v157 = vld [vmem:[%s1 + $0x3a0] sm:$0xff]
  %v158 = vld [vmem:[%s1 + $0x3a8] sm:$0xff]
  %v159 = vld [vmem:[%s1 + $0x3b0] sm:$0xff]
  %v160 = vld [vmem:[%s1 + $0x3b8] sm:$0xff]
  %v161 = vld [vmem:[%s1 + $0x3c0] sm:$0xff]
  %v162 = vld [vmem:[%s1 + $0x3c8] sm:$0xff]
  %v163 = vld [vmem:[%s1 + $0x3d0] sm:$0xff]
  %v164 = vld [vmem:[%s1 + $0x3d8] sm:$0xff]
  %v165 = vld [vmem:[%s1 + $0x3e0] sm:$0xff]
  %v166 = vld [vmem:[%s1 + $0x3e8] sm:$0xff]
  %v167 = vld [vmem:[%s1 + $0x3f0] sm:$0xff]
  %v168 = vld [vmem:[%s1 + $0x3f8] sm:$0xff]
  %v169 = vld [vmem:[%s1 + $0x400] sm:$0xff]
  %v170 = vld [vmem:[%s1 + $0x408] sm:$0xff]
  %v171 = vld [vmem:[%s1 + $0x410] sm:$0xff]
  %v172 = vld [vmem:[%s1 + $0x418] sm:$0xff]
  %v173 = vld [vmem:[%s1 + $0x420] sm:$0xff]
  %v174 = vld [vmem:[%s1 + $0x428] sm:$0xff]
  %v175 = vld [vmem:[%s1 + $0x430] sm:$0xff]
  %v176 = vld [vmem:[%s1 + $0x438] sm:$0xff]
  %v177 = vld [vmem:[%s1 + $0x440] sm:$0xff]
  %v178 = vld [vmem:[%s1 + $0x448] sm:$0xff]
  %v179 = vld [vmem:[%s1 + $0x450] sm:$0xff]
  %v180 = vld [vmem:[%s1 + $0x458] sm:$0xff]
  %v181 = vld [vmem:[%s1 + $0x460] sm:$0xff]
  %v182 = vld [vmem:[%s1 + $0x468] sm:$0xff]
  %v183 = vld [vmem:[%s1 + $0x470] sm:$0xff]
  %v184 = vld [vmem:[%s1 + $0x478] sm:$0xff]
  %v185 = vld [vmem:[%s1 + $0x480] sm:$0xff]
  %v186 = vld [vmem:[%s1 + $0x488] sm:$0xff]
  %v187 = vld [vmem:[%s1 + $0x490] sm:$0xff]
  %v188 = vld [vmem:[%s1 + $0x498] sm:$0xff]
  %v189 = vld [vmem:[%s1 + $0x4a0] sm:$0xff]
  %v190 = vld [vmem:[%s1 + $0x4a8] sm:$0xff]
  %v191 = vld [vmem:[%s1 + $0x4b0] sm:$0xff]
  %v192 = vld [vmem:[%s1 + $0x4b8] sm:$0xff]
  %v193 = vld [vmem:[%s1 + $0x4c0] sm:$0xff]
  %v194 = vld [vmem:[%s1 + $0x4c8] sm:$0xff]
  %v195 = vld [vmem:[%s1 + $0x4d0] sm:$0xff]
  %v196 = vld [vmem:[%s1 + $0x4d8] sm:$0xff]
  %v197 = vld [vmem:[%s1 + $0x4e0] sm:$0xff]
  %v198 = vld [vmem:[%s1 + $0x4e8] sm:$0xff]
  %v199 = vld [vmem:[%s1 + $0x4f0] sm:$0xff]
  %v200 = vld [vmem:[%s1 + $0x4f8] sm:$0xff]
  %v201 = vld [vmem:[%s1 + $0x500] sm:$0xff]
  %v202 = vld [vmem:[%s1 + $0x508] sm:$0xff]
  %v203 = vld [vmem:[%s2] sm:$0xf]
  %v205 = vlaneseq
  %v206 = vshrl.u32 %v205, 7
  %v207 = vsub.s32 0, %v206
  %v208 = vrot.slane %v203, %v207
  %v209 = vlaneseq
  %v210 = vshrl.u32 %v209, 7
  %v211 = vsub.s32 1, %v210
  %v212 = vrot.slane %v203, %v211
  %v213 = vlaneseq
  %v214 = vshrl.u32 %v213, 7
  %v215 = vsub.s32 2, %v214
  %v216 = vrot.slane %v203, %v215
  %v217 = vlaneseq
  %v218 = vshrl.u32 %v217, 7
  %v219 = vsub.s32 3, %v218
  %v220 = vrot.slane %v203, %v219
  %v387 = vunpack.c.l.b16 %v41
  %v388 = vunpack.c.h.b16 %v41
  %v389 = vunpack.c.l.b16 %v42
  %v390 = vunpack.c.h.b16 %v42
  %v391 = vunpack.c.l.b16 %v43
  %v392 = vunpack.c.h.b16 %v43
  %v393 = vunpack.c.l.b16 %v44
  %v394 = vunpack.c.h.b16 %v44
  %v395 = vunpack.c.l.b16 %v45
  %v396 = vunpack.c.h.b16 %v45
  %v397 = vunpack.c.l.b16 %v46
  %v398 = vunpack.c.h.b16 %v46
  %v399 = vunpack.c.l.b16 %v47
  %v400 = vunpack.c.h.b16 %v47
  %v401 = vunpack.c.l.b16 %v48
  %v402 = vunpack.c.h.b16 %v48
  %v403 = vunpack.c.l.b16 %v49
  %v404 = vunpack.c.h.b16 %v49
  %v405 = vunpack.c.l.b16 %v50
  %v406 = vunpack.c.h.b16 %v50
  %v407 = vunpack.c.l.b16 %v51
  %v408 = vunpack.c.h.b16 %v51
  %v409 = vunpack.c.l.b16 %v52
  %v410 = vunpack.c.h.b16 %v52
  %v411 = vunpack.c.l.b16 %v53
  %v412 = vunpack.c.h.b16 %v53
  %v413 = vunpack.c.l.b16 %v54
  %v414 = vunpack.c.h.b16 %v54
  %v415 = vunpack.c.l.b16 %v55
  %v416 = vunpack.c.h.b16 %v55
  %v417 = vunpack.c.l.b16 %v56
  %v418 = vunpack.c.h.b16 %v56
  %v419 = vunpack.c.l.b16 %v57
  %v420 = vunpack.c.h.b16 %v57
  %v421 = vunpack.c.l.b16 %v58
  %v422 = vunpack.c.h.b16 %v58
  %v423 = vunpack.c.l.b16 %v59
  %v424 = vunpack.c.h.b16 %v59
  %v425 = vunpack.c.l.b16 %v60
  %v426 = vunpack.c.h.b16 %v60
  %v427 = vunpack.c.l.b16 %v61
  %v428 = vunpack.c.h.b16 %v61
  %v429 = vunpack.c.l.b16 %v62
  %v430 = vunpack.c.h.b16 %v62
  %v431 = vunpack.c.l.b16 %v63
  %v432 = vunpack.c.h.b16 %v63
  %v433 = vunpack.c.l.b16 %v64
  %v434 = vunpack.c.h.b16 %v64
  %v435 = vunpack.c.l.b16 %v65
  %v436 = vunpack.c.h.b16 %v65
  %v437 = vunpack.c.l.b16 %v66
  %v438 = vunpack.c.h.b16 %v66
  %v439 = vunpack.c.l.b16 %v67
  %v440 = vunpack.c.h.b16 %v67
  %v441 = vunpack.c.l.b16 %v68
  %v442 = vunpack.c.h.b16 %v68
  %v443 = vunpack.c.l.b16 %v69
  %v444 = vunpack.c.h.b16 %v69
  %v445 = vunpack.c.l.b16 %v70
  %v446 = vunpack.c.h.b16 %v70
  %v447 = vunpack.c.l.b16 %v71
  %v448 = vunpack.c.h.b16 %v71
  %v449 = vunpack.c.l.b16 %v72
  %v450 = vunpack.c.h.b16 %v72
  %v451 = vunpack.c.l.b16 %v73
  %v452 = vunpack.c.h.b16 %v73
  %v453 = vunpack.c.l.b16 %v74
  %v454 = vunpack.c.h.b16 %v74
  %v455 = vunpack.c.l.b16 %v75
  %v456 = vunpack.c.h.b16 %v75
  %v457 = vunpack.c.l.b16 %v76
  %v458 = vunpack.c.h.b16 %v76
  %v459 = vunpack.c.l.b16 %v77
  %v460 = vunpack.c.h.b16 %v77
  %v461 = vunpack.c.l.b16 %v78
  %v462 = vunpack.c.h.b16 %v78
  %v463 = vunpack.c.l.b16 %v79
  %v464 = vunpack.c.h.b16 %v79
  %v465 = vunpack.c.l.b16 %v80
  %v466 = vunpack.c.h.b16 %v80
  %v467 = vunpack.c.l.b16 %v81
  %v468 = vunpack.c.h.b16 %v81
  %v469 = vunpack.c.l.b16 %v82
  %v470 = vunpack.c.h.b16 %v82
  %v471 = vunpack.c.l.b16 %v83
  %v472 = vunpack.c.h.b16 %v83
  %v473 = vunpack.c.l.b16 %v84
  %v474 = vunpack.c.h.b16 %v84
  %v475 = vunpack.c.l.b16 %v85
  %v476 = vunpack.c.h.b16 %v85
  %v477 = vunpack.c.l.b16 %v86
  %v478 = vunpack.c.h.b16 %v86
  %v479 = vunpack.c.l.b16 %v87
  %v480 = vunpack.c.h.b16 %v87
  %v481 = vunpack.c.l.b16 %v88
  %v482 = vunpack.c.h.b16 %v88
  %v483 = vunpack.c.l.b16 %v89
  %v484 = vunpack.c.h.b16 %v89
  %v485 = vunpack.c.l.b16 %v90
  %v486 = vunpack.c.h.b16 %v90
  %v487 = vunpack.c.l.b16 %v91
  %v488 = vunpack.c.h.b16 %v91
  %v489 = vunpack.c.l.b16 %v92
  %v490 = vunpack.c.h.b16 %v92
  %v491 = vunpack.c.l.b16 %v93
  %v492 = vunpack.c.h.b16 %v93
  %v493 = vunpack.c.l.b16 %v94
  %v494 = vunpack.c.h.b16 %v94
  %v495 = vunpack.c.l.b16 %v95
  %v496 = vunpack.c.h.b16 %v95
  %v497 = vunpack.c.l.b16 %v96
  %v498 = vunpack.c.h.b16 %v96
  %v499 = vunpack.c.l.b16 %v97
  %v500 = vunpack.c.h.b16 %v97
  %v501 = vunpack.c.l.b16 %v98
  %v502 = vunpack.c.h.b16 %v98
  %v503 = vunpack.c.l.b16 %v99
  %v504 = vunpack.c.h.b16 %v99
  %v505 = vunpack.c.l.b16 %v100
  %v506 = vunpack.c.h.b16 %v100
  %v507 = vunpack.c.l.b16 %v101
  %v508 = vunpack.c.h.b16 %v101
  %v509 = vunpack.c.l.b16 %v102
  %v510 = vunpack.c.h.b16 %v102
  %v511 = vunpack.c.l.b16 %v103
  %v512 = vunpack.c.h.b16 %v103
  %v513 = vunpack.c.l.b16 %v104
  %v514 = vunpack.c.h.b16 %v104
  %v515 = vunpack.c.l.b16 %v105
  %v516 = vunpack.c.h.b16 %v105
  %v517 = vunpack.c.l.b16 %v106
  %v518 = vunpack.c.h.b16 %v106
  %v519 = vunpack.c.l.b16 %v107
  %v520 = vunpack.c.h.b16 %v107
  %v521 = vunpack.c.l.b16 %v108
  %v522 = vunpack.c.h.b16 %v108
  %v523 = vunpack.c.l.b16 %v109
  %v524 = vunpack.c.h.b16 %v109
  %v525 = vunpack.c.l.b16 %v110
  %v526 = vunpack.c.h.b16 %v110
  %v527 = vunpack.c.l.b16 %v111
  %v528 = vunpack.c.h.b16 %v111
  %v529 = vunpack.c.l.b16 %v112
  %v530 = vunpack.c.h.b16 %v112
  %v531 = vunpack.c.l.b16 %v113
  %v532 = vunpack.c.h.b16 %v113
  %v533 = vunpack.c.l.b16 %v114
  %v534 = vunpack.c.h.b16 %v114
  %v535 = vunpack.c.l.b16 %v115
  %v536 = vunpack.c.h.b16 %v115
  %v537 = vunpack.c.l.b16 %v116
  %v538 = vunpack.c.h.b16 %v116
  %v539 = vunpack.c.l.b16 %v117
  %v540 = vunpack.c.h.b16 %v117
  %v541 = vunpack.c.l.b16 %v118
  %v542 = vunpack.c.h.b16 %v118
  %v543 = vunpack.c.l.b16 %v119
  %v544 = vunpack.c.h.b16 %v119
  %v545 = vunpack.c.l.b16 %v120
  %v546 = vunpack.c.h.b16 %v120
  %v547 = vunpack.c.l.b16 %v121
  %v548 = vunpack.c.h.b16 %v121
  %v549 = vunpack.c.l.b16 %v122
  %v550 = vunpack.c.h.b16 %v122
  %v551 = vunpack.c.l.b16 %v123
  %v552 = vunpack.c.h.b16 %v123
  %v553 = vunpack.c.l.b16 %v124
  %v554 = vunpack.c.h.b16 %v124
  %v555 = vunpack.c.l.b16 %v125
  %v556 = vunpack.c.h.b16 %v125
  %v557 = vunpack.c.l.b16 %v126
  %v558 = vunpack.c.h.b16 %v126
  %v559 = vunpack.c.l.b16 %v127
  %v560 = vunpack.c.h.b16 %v127
  %v561 = vunpack.c.l.b16 %v128
  %v562 = vunpack.c.h.b16 %v128
  %v563 = vunpack.c.l.b16 %v129
  %v564 = vunpack.c.h.b16 %v129
  %v565 = vunpack.c.l.b16 %v130
  %v566 = vunpack.c.h.b16 %v130
  %v567 = vunpack.c.l.b16 %v131
  %v568 = vunpack.c.h.b16 %v131
  %v569 = vunpack.c.l.b16 %v132
  %v570 = vunpack.c.h.b16 %v132
  %v571 = vunpack.c.l.b16 %v133
  %v572 = vunpack.c.h.b16 %v133
  %v573 = vunpack.c.l.b16 %v134
  %v574 = vunpack.c.h.b16 %v134
  %v575 = vunpack.c.l.b16 %v135
  %v576 = vunpack.c.h.b16 %v135
  %v577 = vunpack.c.l.b16 %v136
  %v578 = vunpack.c.h.b16 %v136
  %v579 = vunpack.c.l.b16 %v137
  %v580 = vunpack.c.h.b16 %v137
  %v581 = vunpack.c.l.b16 %v138
  %v582 = vunpack.c.h.b16 %v138
  %v583 = vunpack.c.l.b16 %v139
  %v584 = vunpack.c.h.b16 %v139
  %v585 = vunpack.c.l.b16 %v140
  %v586 = vunpack.c.h.b16 %v140
  %v587 = vunpack.c.l.b16 %v141
  %v588 = vunpack.c.h.b16 %v141
  %v589 = vunpack.c.l.b16 %v142
  %v590 = vunpack.c.h.b16 %v142
  %v591 = vunpack.c.l.b16 %v143
  %v592 = vunpack.c.h.b16 %v143
  %v593 = vunpack.c.l.b16 %v144
  %v594 = vunpack.c.h.b16 %v144
  %v595 = vunpack.c.l.b16 %v145
  %v596 = vunpack.c.h.b16 %v145
  %v597 = vunpack.c.l.b16 %v146
  %v598 = vunpack.c.h.b16 %v146
  %v599 = vunpack.c.l.b16 %v147
  %v600 = vunpack.c.h.b16 %v147
  %v601 = vunpack.c.l.b16 %v148
  %v602 = vunpack.c.h.b16 %v148
  %v603 = vunpack.c.l.b16 %v149
  %v604 = vunpack.c.h.b16 %v149
  %v605 = vunpack.c.l.b16 %v150
  %v606 = vunpack.c.h.b16 %v150
  %v607 = vunpack.c.l.b16 %v151
  %v608 = vunpack.c.h.b16 %v151
  %v609 = vunpack.c.l.b16 %v152
  %v610 = vunpack.c.h.b16 %v152
  %v611 = vunpack.c.l.b16 %v153
  %v612 = vunpack.c.h.b16 %v153
  %v613 = vunpack.c.l.b16 %v154
  %v614 = vunpack.c.h.b16 %v154
  %v615 = vunpack.c.l.b16 %v155
  %v616 = vunpack.c.h.b16 %v155
  %v617 = vunpack.c.l.b16 %v156
  %v618 = vunpack.c.h.b16 %v156
  %v619 = vunpack.c.l.b16 %v157
  %v620 = vunpack.c.h.b16 %v157
  %v621 = vunpack.c.l.b16 %v158
  %v622 = vunpack.c.h.b16 %v158
  %v623 = vunpack.c.l.b16 %v159
  %v624 = vunpack.c.h.b16 %v159
  %v625 = vunpack.c.l.b16 %v160
  %v626 = vunpack.c.h.b16 %v160
  %v627 = vunpack.c.l.b16 %v161
  %v628 = vunpack.c.h.b16 %v161
  %v629 = vunpack.c.l.b16 %v162
  %v630 = vunpack.c.h.b16 %v162
  %v631 = vunpack.c.l.b16 %v163
  %v632 = vunpack.c.h.b16 %v163
  %v633 = vunpack.c.l.b16 %v164
  %v634 = vunpack.c.h.b16 %v164
  %v635 = vunpack.c.l.b16 %v165
  %v636 = vunpack.c.h.b16 %v165
  %v637 = vunpack.c.l.b16 %v166
  %v638 = vunpack.c.h.b16 %v166
  %v639 = vunpack.c.l.b16 %v167
  %v640 = vunpack.c.h.b16 %v167
  %v641 = vunpack.c.l.b16 %v168
  %v642 = vunpack.c.h.b16 %v168
  %v643 = vunpack.c.l.b16 %v169
  %v644 = vunpack.c.h.b16 %v169
  %v645 = vunpack.c.l.b16 %v170
  %v646 = vunpack.c.h.b16 %v170
  %v647 = vunpack.c.l.b16 %v171
  %v648 = vunpack.c.h.b16 %v171
  %v649 = vunpack.c.l.b16 %v172
  %v650 = vunpack.c.h.b16 %v172
  %v651 = vunpack.c.l.b16 %v173
  %v652 = vunpack.c.h.b16 %v173
  %v653 = vunpack.c.l.b16 %v174
  %v654 = vunpack.c.h.b16 %v174
  %v655 = vunpack.c.l.b16 %v175
  %v656 = vunpack.c.h.b16 %v175
  %v657 = vunpack.c.l.b16 %v176
  %v658 = vunpack.c.h.b16 %v176
  %v659 = vunpack.c.l.b16 %v177
  %v660 = vunpack.c.h.b16 %v177
  %v661 = vunpack.c.l.b16 %v178
  %v662 = vunpack.c.h.b16 %v178
  %v663 = vunpack.c.l.b16 %v179
  %v664 = vunpack.c.h.b16 %v179
  %v665 = vunpack.c.l.b16 %v180
  %v666 = vunpack.c.h.b16 %v180
  %v667 = vunpack.c.l.b16 %v181
  %v668 = vunpack.c.h.b16 %v181
  %v669 = vunpack.c.l.b16 %v182
  %v670 = vunpack.c.h.b16 %v182
  %v671 = vunpack.c.l.b16 %v183
  %v672 = vunpack.c.h.b16 %v183
  %v673 = vunpack.c.l.b16 %v184
  %v674 = vunpack.c.h.b16 %v184
  %v675 = vunpack.c.l.b16 %v185
  %v676 = vunpack.c.h.b16 %v185
  %v677 = vunpack.c.l.b16 %v186
  %v678 = vunpack.c.h.b16 %v186
  %v679 = vunpack.c.l.b16 %v187
  %v680 = vunpack.c.h.b16 %v187
  %v681 = vunpack.c.l.b16 %v188
  %v682 = vunpack.c.h.b16 %v188
  %v683 = vunpack.c.l.b16 %v189
  %v684 = vunpack.c.h.b16 %v189
  %v685 = vunpack.c.l.b16 %v190
  %v686 = vunpack.c.h.b16 %v190
  %v687 = vunpack.c.l.b16 %v191
  %v688 = vunpack.c.h.b16 %v191
  %v689 = vunpack.c.l.b16 %v192
  %v690 = vunpack.c.h.b16 %v192
  %v691 = vunpack.c.l.b16 %v193
  %v692 = vunpack.c.h.b16 %v193
  %v693 = vunpack.c.l.b16 %v194
  %v694 = vunpack.c.h.b16 %v194
  %v695 = vunpack.c.l.b16 %v195
  %v696 = vunpack.c.h.b16 %v195
  %v697 = vunpack.c.l.b16 %v196
  %v698 = vunpack.c.h.b16 %v196
  %v699 = vunpack.c.l.b16 %v197
  %v700 = vunpack.c.h.b16 %v197
  %v701 = vunpack.c.l.b16 %v198
  %v702 = vunpack.c.h.b16 %v198
  %v703 = vunpack.c.l.b16 %v199
  %v704 = vunpack.c.h.b16 %v199
  %v705 = vunpack.c.l.b16 %v200
  %v706 = vunpack.c.h.b16 %v200
  %v707 = vunpack.c.l.b16 %v201
  %v708 = vunpack.c.h.b16 %v201
  %v709 = vunpack.c.l.b16 %v202
  %v710 = vunpack.c.h.b16 %v202
  %v711 = vpack.c.b16 %v391, %v387
  %v712 = vpack.c.b16 %v392, %v388
  %v713 = vpack.c.b16 %v393, %v389
  %v714 = vpack.c.b16 %v394, %v390
  %v715 = vpack.c.b16 %v399, %v395
  %v716 = vpack.c.b16 %v400, %v396
  %v717 = vpack.c.b16 %v401, %v397
  %v718 = vpack.c.b16 %v402, %v398
  %v719 = vpack.c.b16 %v407, %v403
  %v720 = vpack.c.b16 %v408, %v404
  %v721 = vpack.c.b16 %v409, %v405
  %v722 = vpack.c.b16 %v410, %v406
  %v723 = vpack.c.b16 %v415, %v411
  %v724 = vpack.c.b16 %v416, %v412
  %v725 = vpack.c.b16 %v417, %v413
  %v726 = vpack.c.b16 %v418, %v414
  %v727 = vpack.c.b16 %v423, %v419
  %v728 = vpack.c.b16 %v424, %v420
  %v729 = vpack.c.b16 %v425, %v421
  %v730 = vpack.c.b16 %v426, %v422
  %v731 = vpack.c.b16 %v431, %v427
  %v732 = vpack.c.b16 %v432, %v428
  %v733 = vpack.c.b16 %v433, %v429
  %v734 = vpack.c.b16 %v434, %v430
  %v735 = vpack.c.b16 %v439, %v435
  %v736 = vpack.c.b16 %v440, %v436
  %v737 = vpack.c.b16 %v441, %v437
  %v738 = vpack.c.b16 %v442, %v438
  %v739 = vpack.c.b16 %v447, %v443
  %v740 = vpack.c.b16 %v448, %v444
  %v741 = vpack.c.b16 %v449, %v445
  %v742 = vpack.c.b16 %v450, %v446
  %v743 = vpack.c.b16 %v455, %v451
  %v744 = vpack.c.b16 %v456, %v452
  %v745 = vpack.c.b16 %v457, %v453
  %v746 = vpack.c.b16 %v458, %v454
  %v747 = vpack.c.b16 %v463, %v459
  %v748 = vpack.c.b16 %v464, %v460
  %v749 = vpack.c.b16 %v465, %v461
  %v750 = vpack.c.b16 %v466, %v462
  %v751 = vpack.c.b16 %v471, %v467
  %v752 = vpack.c.b16 %v472, %v468
  %v753 = vpack.c.b16 %v473, %v469
  %v754 = vpack.c.b16 %v474, %v470
  %v755 = vpack.c.b16 %v479, %v475
  %v756 = vpack.c.b16 %v480, %v476
  %v757 = vpack.c.b16 %v481, %v477
  %v758 = vpack.c.b16 %v482, %v478
  %v759 = vpack.c.b16 %v487, %v483
  %v760 = vpack.c.b16 %v488, %v484
  %v761 = vpack.c.b16 %v489, %v485
  %v762 = vpack.c.b16 %v490, %v486
  %v763 = vpack.c.b16 %v495, %v491
  %v764 = vpack.c.b16 %v496, %v492
  %v765 = vpack.c.b16 %v497, %v493
  %v766 = vpack.c.b16 %v498, %v494
  %v767 = vpack.c.b16 %v503, %v499
  %v768 = vpack.c.b16 %v504, %v500
  %v769 = vpack.c.b16 %v505, %v501
  %v770 = vpack.c.b16 %v506, %v502
  %v771 = vpack.c.b16 %v511, %v507
  %v772 = vpack.c.b16 %v512, %v508
  %v773 = vpack.c.b16 %v513, %v509
  %v774 = vpack.c.b16 %v514, %v510
  %v775 = vpack.c.b16 %v519, %v515
  %v776 = vpack.c.b16 %v520, %v516
  %v777 = vpack.c.b16 %v521, %v517
  %v778 = vpack.c.b16 %v522, %v518
  %v779 = vpack.c.b16 %v527, %v523
  %v780 = vpack.c.b16 %v528, %v524
  %v781 = vpack.c.b16 %v529, %v525
  %v782 = vpack.c.b16 %v530, %v526
  %v783 = vpack.c.b16 %v535, %v531
  %v784 = vpack.c.b16 %v536, %v532
  %v785 = vpack.c.b16 %v537, %v533
  %v786 = vpack.c.b16 %v538, %v534
  %v787 = vpack.c.b16 %v543, %v539
  %v788 = vpack.c.b16 %v544, %v540
  %v789 = vpack.c.b16 %v545, %v541
  %v790 = vpack.c.b16 %v546, %v542
  %v791 = vpack.c.b16 %v551, %v547
  %v792 = vpack.c.b16 %v552, %v548
  %v793 = vpack.c.b16 %v553, %v549
  %v794 = vpack.c.b16 %v554, %v550
  %v795 = vpack.c.b16 %v559, %v555
  %v796 = vpack.c.b16 %v560, %v556
  %v797 = vpack.c.b16 %v561, %v557
  %v798 = vpack.c.b16 %v562, %v558
  %v799 = vpack.c.b16 %v567, %v563
  %v800 = vpack.c.b16 %v568, %v564
  %v801 = vpack.c.b16 %v569, %v565
  %v802 = vpack.c.b16 %v570, %v566
  %v803 = vpack.c.b16 %v575, %v571
  %v804 = vpack.c.b16 %v576, %v572
  %v805 = vpack.c.b16 %v577, %v573
  %v806 = vpack.c.b16 %v578, %v574
  %v807 = vpack.c.b16 %v583, %v579
  %v808 = vpack.c.b16 %v584, %v580
  %v809 = vpack.c.b16 %v585, %v581
  %v810 = vpack.c.b16 %v586, %v582
  %v811 = vpack.c.b16 %v591, %v587
  %v812 = vpack.c.b16 %v592, %v588
  %v813 = vpack.c.b16 %v593, %v589
  %v814 = vpack.c.b16 %v594, %v590
  %v815 = vpack.c.b16 %v599, %v595
  %v816 = vpack.c.b16 %v600, %v596
  %v817 = vpack.c.b16 %v601, %v597
  %v818 = vpack.c.b16 %v602, %v598
  %v819 = vpack.c.b16 %v607, %v603
  %v820 = vpack.c.b16 %v608, %v604
  %v821 = vpack.c.b16 %v609, %v605
  %v822 = vpack.c.b16 %v610, %v606
  %v823 = vpack.c.b16 %v615, %v611
  %v824 = vpack.c.b16 %v616, %v612
  %v825 = vpack.c.b16 %v617, %v613
  %v826 = vpack.c.b16 %v618, %v614
  %v827 = vpack.c.b16 %v623, %v619
  %v828 = vpack.c.b16 %v624, %v620
  %v829 = vpack.c.b16 %v625, %v621
  %v830 = vpack.c.b16 %v626, %v622
  %v831 = vpack.c.b16 %v631, %v627
  %v832 = vpack.c.b16 %v632, %v628
  %v833 = vpack.c.b16 %v633, %v629
  %v834 = vpack.c.b16 %v634, %v630
  %v835 = vpack.c.b16 %v639, %v635
  %v836 = vpack.c.b16 %v640, %v636
  %v837 = vpack.c.b16 %v641, %v637
  %v838 = vpack.c.b16 %v642, %v638
  %v839 = vpack.c.b16 %v647, %v643
  %v840 = vpack.c.b16 %v648, %v644
  %v841 = vpack.c.b16 %v649, %v645
  %v842 = vpack.c.b16 %v650, %v646
  %v843 = vpack.c.b16 %v655, %v651
  %v844 = vpack.c.b16 %v656, %v652
  %v845 = vpack.c.b16 %v657, %v653
  %v846 = vpack.c.b16 %v658, %v654
  %v847 = vpack.c.b16 %v663, %v659
  %v848 = vpack.c.b16 %v664, %v660
  %v849 = vpack.c.b16 %v665, %v661
  %v850 = vpack.c.b16 %v666, %v662
  %v851 = vpack.c.b16 %v671, %v667
  %v852 = vpack.c.b16 %v672, %v668
  %v853 = vpack.c.b16 %v673, %v669
  %v854 = vpack.c.b16 %v674, %v670
  %v855 = vpack.c.b16 %v679, %v675
  %v856 = vpack.c.b16 %v680, %v676
  %v857 = vpack.c.b16 %v681, %v677
  %v858 = vpack.c.b16 %v682, %v678
  %v859 = vpack.c.b16 %v687, %v683
  %v860 = vpack.c.b16 %v688, %v684
  %v861 = vpack.c.b16 %v689, %v685
  %v862 = vpack.c.b16 %v690, %v686
  %v863 = vpack.c.b16 %v695, %v691
  %v864 = vpack.c.b16 %v696, %v692
  %v865 = vpack.c.b16 %v697, %v693
  %v866 = vpack.c.b16 %v698, %v694
  %v867 = vpack.c.b16 %v703, %v699
  %v868 = vpack.c.b16 %v704, %v700
  %v869 = vpack.c.b16 %v705, %v701
  %v870 = vpack.c.b16 %v706, %v702
  %v871 = vpack.c.b16 %v707, %v707
  %v872 = vpack.c.b16 %v708, %v708
  %v873 = vpack.c.b16 %v709, %v709
  %v874 = vpack.c.b16 %v710, %v710
  %vm1035 = vcmask 64512
  %v1037 = vsel %vm1035, %v40, 0
  %vm1039 = vcmask 1043456
  %v1041 = vsel %vm1039, %v871, 0
  %v1044 = vsel %vm1039, %v872, 0
  %v1047 = vsel %vm1039, %v873, 0
  %v1050 = vsel %vm1039, %v874, 0
  %1052 = vmatprep.subr.bf16.mxu0 %v740
  %1053 = vmatpush1.bf16.msra.mxu0 %v739
  %1054 = vmatprep.subr.bf16.mxu0 %v736
  %1055 = vmatpush1.bf16.msra.mxu0 %v735
  %1056 = vmatprep.subr.bf16.mxu0 %v732
  %1057 = vmatpush1.bf16.msra.mxu0 %v731
  %1058 = vmatprep.subr.bf16.mxu0 %v728
  %1059 = vmatpush1.bf16.msra.mxu0 %v727
  %1060 = vmatprep.subr.bf16.mxu0 %v724
  %1061 = vmatpush1.bf16.msra.mxu0 %v723
  %1062 = vmatprep.subr.bf16.mxu0 %v720
  %1063 = vmatpush1.bf16.msra.mxu0 %v719
  %1064 = vmatprep.subr.bf16.mxu0 %v716
  %1065 = vmatpush1.bf16.msra.mxu0 %v715
  %1066 = vmatprep.subr.bf16.mxu0 %v712
  %1067 = vmatpush1.bf16.msra.mxu0 %v711
  %1068 = vmatprep.subr.bf16.mxu0 %v772
  %1069 = vmatpush2.bf16.msra.mxu0 %v771
  %1070 = vmatprep.subr.bf16.mxu0 %v768
  %1071 = vmatpush2.bf16.msra.mxu0 %v767
  %1072 = vmatprep.subr.bf16.mxu0 %v764
  %1073 = vmatpush2.bf16.msra.mxu0 %v763
  %1074 = vmatprep.subr.bf16.mxu0 %v760
  %1075 = vmatpush2.bf16.msra.mxu0 %v759
  %1076 = vmatprep.subr.bf16.mxu0 %v756
  %1077 = vmatpush2.bf16.msra.mxu0 %v755
  %1078 = vmatprep.subr.bf16.mxu0 %v752
  %1079 = vmatpush2.bf16.msra.mxu0 %v751
  %1080 = vmatprep.subr.bf16.mxu0 %v748
  %1081 = vmatpush2.bf16.msra.mxu0 %v747
  %1082 = vmatprep.subr.bf16.mxu0 %v744
  %1083 = vmatpush2.bf16.msra.mxu0 %v743
  %1084 = vmatprep.mubr.bf16.mxu0 %v36
  %1085 = vmatmul.mubr.bf16.gmra.mxu0 %v35
  %v1086 = vpop.f32.mrf.mxu0
  %v1087 = vadd.f32 %v208, %v1086
  %v1088 = vpop.f32.mrf.mxu0
  %v1089 = vadd.f32 %v212, %v1088
  %v1090 = vpop.f32.mrf.mxu0
  %v1091 = vpop.f32.mrf.mxu0
  %1092 = vdwg.mxu0
  %1093 = vmatprep.subr.bf16.mxu0 %v804
  %1094 = vmatpush1.bf16.msra.mxu0 %v803
  %1095 = vmatprep.subr.bf16.mxu0 %v800
  %1096 = vmatpush1.bf16.msra.mxu0 %v799
  %1097 = vmatprep.subr.bf16.mxu0 %v796
  %1098 = vmatpush1.bf16.msra.mxu0 %v795
  %1099 = vmatprep.subr.bf16.mxu0 %v792
  %1100 = vmatpush1.bf16.msra.mxu0 %v791
  %1101 = vmatprep.subr.bf16.mxu0 %v788
  %1102 = vmatpush1.bf16.msra.mxu0 %v787
  %1103 = vmatprep.subr.bf16.mxu0 %v784
  %1104 = vmatpush1.bf16.msra.mxu0 %v783
  %1105 = vmatprep.subr.bf16.mxu0 %v780
  %1106 = vmatpush1.bf16.msra.mxu0 %v779
  %1107 = vmatprep.subr.bf16.mxu0 %v776
  %1108 = vmatpush1.bf16.msra.mxu0 %v775
  %1109 = vmatprep.subr.bf16.mxu0 %v836
  %1110 = vmatpush2.bf16.msra.mxu0 %v835
  %1111 = vmatprep.subr.bf16.mxu0 %v832
  %1112 = vmatpush2.bf16.msra.mxu0 %v831
  %1113 = vmatprep.subr.bf16.mxu0 %v828
  %1114 = vmatpush2.bf16.msra.mxu0 %v827
  %1115 = vmatprep.subr.bf16.mxu0 %v824
  %1116 = vmatpush2.bf16.msra.mxu0 %v823
  %1117 = vmatprep.subr.bf16.mxu0 %v820
  %1118 = vmatpush2.bf16.msra.mxu0 %v819
  %1119 = vmatprep.subr.bf16.mxu0 %v816
  %1120 = vmatpush2.bf16.msra.mxu0 %v815
  %1121 = vmatprep.subr.bf16.mxu0 %v812
  %1122 = vmatpush2.bf16.msra.mxu0 %v811
  %1123 = vmatprep.subr.bf16.mxu0 %v808
  %1124 = vmatpush2.bf16.msra.mxu0 %v807
  %1125 = vmatprep.mubr.bf16.mxu0 %v38
  %1126 = vmatmul.mubr.bf16.gmra.mxu0 %v37
  %v1127 = vpop.f32.mrf.mxu0
  %v1128 = vadd.f32 %v1087, %v1127
  %v1129 = vpop.f32.mrf.mxu0
  %v1130 = vadd.f32 %v1089, %v1129
  %v1131 = vpop.f32.mrf.mxu0
  %v1132 = vpop.f32.mrf.mxu0
  %1133 = vdwg.mxu0
  %1134 = vmatprep.subr.bf16.mxu0 %v868
  %1135 = vmatpush1.bf16.msra.mxu0 %v867
  %1136 = vmatprep.subr.bf16.mxu0 %v864
  %1137 = vmatpush1.bf16.msra.mxu0 %v863
  %1138 = vmatprep.subr.bf16.mxu0 %v860
  %1139 = vmatpush1.bf16.msra.mxu0 %v859
  %1140 = vmatprep.subr.bf16.mxu0 %v856
  %1141 = vmatpush1.bf16.msra.mxu0 %v855
  %1142 = vmatprep.subr.bf16.mxu0 %v852
  %1143 = vmatpush1.bf16.msra.mxu0 %v851
  %1144 = vmatprep.subr.bf16.mxu0 %v848
  %1145 = vmatpush1.bf16.msra.mxu0 %v847
  %1146 = vmatprep.subr.bf16.mxu0 %v844
  %1147 = vmatpush1.bf16.msra.mxu0 %v843
  %1148 = vmatprep.subr.bf16.mxu0 %v840
  %1149 = vmatpush1.bf16.msra.mxu0 %v839
  %1150 = vmatprep.subr.bf16.mxu0 0
  %1151 = vmatpush2.bf16.msra.mxu0 0
  %1152 = vmatprep.subr.bf16.mxu0 0
  %1153 = vmatpush2.bf16.msra.mxu0 0
  %1154 = vmatprep.subr.bf16.mxu0 0
  %1155 = vmatpush2.bf16.msra.mxu0 0
  %1156 = vmatprep.subr.bf16.mxu0 0
  %1157 = vmatpush2.bf16.msra.mxu0 0
  %1158 = vmatprep.subr.bf16.mxu0 0
  %1159 = vmatpush2.bf16.msra.mxu0 0
  %1160 = vmatprep.subr.bf16.mxu0 0
  %1161 = vmatpush2.bf16.msra.mxu0 0
  %1162 = vmatprep.subr.bf16.mxu0 0
  %1163 = vmatpush2.bf16.msra.mxu0 0
  %1164 = vmatprep.subr.bf16.mxu0 %v1044
  %1165 = vmatpush2.bf16.msra.mxu0 %v1041
  %1166 = vmatprep.mubr.bf16.mxu0 %v1037
  %1167 = vmatmul.mubr.bf16.gmra.mxu0 %v39
  %v1168 = vpop.f32.mrf.mxu0
  %v1169 = vadd.f32 %v1128, %v1168
  %v1170 = vpop.f32.mrf.mxu0
  %v1171 = vadd.f32 %v1130, %v1170
  %v1172 = vpop.f32.mrf.mxu0
  %v1173 = vpop.f32.mrf.mxu0
  %1174 = vdwg.mxu0
  %1175 = vmatprep.subr.bf16.mxu0 %v742
  %1176 = vmatpush1.bf16.msra.mxu0 %v741
  %1177 = vmatprep.subr.bf16.mxu0 %v738
  %1178 = vmatpush1.bf16.msra.mxu0 %v737
  %1179 = vmatprep.subr.bf16.mxu0 %v734
  %1180 = vmatpush1.bf16.msra.mxu0 %v733
  %1181 = vmatprep.subr.bf16.mxu0 %v730
  %1182 = vmatpush1.bf16.msra.mxu0 %v729
  %1183 = vmatprep.subr.bf16.mxu0 %v726
  %1184 = vmatpush1.bf16.msra.mxu0 %v725
  %1185 = vmatprep.subr.bf16.mxu0 %v722
  %1186 = vmatpush1.bf16.msra.mxu0 %v721
  %1187 = vmatprep.subr.bf16.mxu0 %v718
  %1188 = vmatpush1.bf16.msra.mxu0 %v717
  %1189 = vmatprep.subr.bf16.mxu0 %v714
  %1190 = vmatpush1.bf16.msra.mxu0 %v713
  %1191 = vmatprep.subr.bf16.mxu0 %v774
  %1192 = vmatpush2.bf16.msra.mxu0 %v773
  %1193 = vmatprep.subr.bf16.mxu0 %v770
  %1194 = vmatpush2.bf16.msra.mxu0 %v769
  %1195 = vmatprep.subr.bf16.mxu0 %v766
  %1196 = vmatpush2.bf16.msra.mxu0 %v765
  %1197 = vmatprep.subr.bf16.mxu0 %v762
  %1198 = vmatpush2.bf16.msra.mxu0 %v761
  %1199 = vmatprep.subr.bf16.mxu0 %v758
  %1200 = vmatpush2.bf16.msra.mxu0 %v757
  %1201 = vmatprep.subr.bf16.mxu0 %v754
  %1202 = vmatpush2.bf16.msra.mxu0 %v753
  %1203 = vmatprep.subr.bf16.mxu0 %v750
  %1204 = vmatpush2.bf16.msra.mxu0 %v749
  %1205 = vmatprep.subr.bf16.mxu0 %v746
  %1206 = vmatpush2.bf16.msra.mxu0 %v745
  %1207 = vmatprep.mubr.bf16.mxu0 %v36
  %1208 = vmatmul.mubr.bf16.gmra.mxu0 %v35
  %v1209 = vpop.f32.mrf.mxu0
  %v1210 = vadd.f32 %v216, %v1209
  %v1211 = vpop.f32.mrf.mxu0
  %v1212 = vadd.f32 %v220, %v1211
  %v1213 = vpop.f32.mrf.mxu0
  %v1214 = vpop.f32.mrf.mxu0
  %1215 = vdwg.mxu0
  %1216 = vmatprep.subr.bf16.mxu0 %v806
  %1217 = vmatpush1.bf16.msra.mxu0 %v805
  %1218 = vmatprep.subr.bf16.mxu0 %v802
  %1219 = vmatpush1.bf16.msra.mxu0 %v801
  %1220 = vmatprep.subr.bf16.mxu0 %v798
  %1221 = vmatpush1.bf16.msra.mxu0 %v797
  %1222 = vmatprep.subr.bf16.mxu0 %v794
  %1223 = vmatpush1.bf16.msra.mxu0 %v793
  %1224 = vmatprep.subr.bf16.mxu0 %v790
  %1225 = vmatpush1.bf16.msra.mxu0 %v789
  %1226 = vmatprep.subr.bf16.mxu0 %v786
  %1227 = vmatpush1.bf16.msra.mxu0 %v785
  %1228 = vmatprep.subr.bf16.mxu0 %v782
  %1229 = vmatpush1.bf16.msra.mxu0 %v781
  %1230 = vmatprep.subr.bf16.mxu0 %v778
  %1231 = vmatpush1.bf16.msra.mxu0 %v777
  %1232 = vmatprep.subr.bf16.mxu0 %v838
  %1233 = vmatpush2.bf16.msra.mxu0 %v837
  %1234 = vmatprep.subr.bf16.mxu0 %v834
  %1235 = vmatpush2.bf16.msra.mxu0 %v833
  %1236 = vmatprep.subr.bf16.mxu0 %v830
  %1237 = vmatpush2.bf16.msra.mxu0 %v829
  %1238 = vmatprep.subr.bf16.mxu0 %v826
  %1239 = vmatpush2.bf16.msra.mxu0 %v825
  %1240 = vmatprep.subr.bf16.mxu0 %v822
  %1241 = vmatpush2.bf16.msra.mxu0 %v821
  %1242 = vmatprep.subr.bf16.mxu0 %v818
  %1243 = vmatpush2.bf16.msra.mxu0 %v817
  %1244 = vmatprep.subr.bf16.mxu0 %v814
  %1245 = vmatpush2.bf16.msra.mxu0 %v813
  %1246 = vmatprep.subr.bf16.mxu0 %v810
  %1247 = vmatpush2.bf16.msra.mxu0 %v809
  %1248 = vmatprep.mubr.bf16.mxu0 %v38
  %1249 = vmatmul.mubr.bf16.gmra.mxu0 %v37
  %v1250 = vpop.f32.mrf.mxu0
  %v1251 = vadd.f32 %v1210, %v1250
  %v1252 = vpop.f32.mrf.mxu0
  %v1253 = vadd.f32 %v1212, %v1252
  %v1254 = vpop.f32.mrf.mxu0
  %v1255 = vpop.f32.mrf.mxu0
  %1256 = vdwg.mxu0
  %1257 = vmatprep.subr.bf16.mxu0 %v870
  %1258 = vmatpush1.bf16.msra.mxu0 %v869
  %1259 = vmatprep.subr.bf16.mxu0 %v866
  %1260 = vmatpush1.bf16.msra.mxu0 %v865
  %1261 = vmatprep.subr.bf16.mxu0 %v862
  %1262 = vmatpush1.bf16.msra.mxu0 %v861
  %1263 = vmatprep.subr.bf16.mxu0 %v858
  %1264 = vmatpush1.bf16.msra.mxu0 %v857
  %1265 = vmatprep.subr.bf16.mxu0 %v854
  %1266 = vmatpush1.bf16.msra.mxu0 %v853
  %1267 = vmatprep.subr.bf16.mxu0 %v850
  %1268 = vmatpush1.bf16.msra.mxu0 %v849
  %1269 = vmatprep.subr.bf16.mxu0 %v846
  %1270 = vmatpush1.bf16.msra.mxu0 %v845
  %1271 = vmatprep.subr.bf16.mxu0 %v842
  %1272 = vmatpush1.bf16.msra.mxu0 %v841
  %1273 = vmatprep.subr.bf16.mxu0 0
  %1274 = vmatpush2.bf16.msra.mxu0 0
  %1275 = vmatprep.subr.bf16.mxu0 0
  %1276 = vmatpush2.bf16.msra.mxu0 0
  %1277 = vmatprep.subr.bf16.mxu0 0
  %1278 = vmatpush2.bf16.msra.mxu0 0
  %1279 = vmatprep.subr.bf16.mxu0 0
  %1280 = vmatpush2.bf16.msra.mxu0 0
  %1281 = vmatprep.subr.bf16.mxu0 0
  %1282 = vmatpush2.bf16.msra.mxu0 0
  %1283 = vmatprep.subr.bf16.mxu0 0
  %1284 = vmatpush2.bf16.msra.mxu0 0
  %1285 = vmatprep.subr.bf16.mxu0 0
  %1286 = vmatpush2.bf16.msra.mxu0 0
  %1287 = vmatprep.subr.bf16.mxu0 %v1050
  %1288 = vmatpush2.bf16.msra.mxu0 %v1047
  %1289 = vmatprep.mubr.bf16.mxu0 %v1037
  %1290 = vmatmul.mubr.bf16.gmra.mxu0 %v39
  %v1291 = vpop.f32.mrf.mxu0
  %v1292 = vadd.f32 %v1251, %v1291
  %v1293 = vpop.f32.mrf.mxu0
  %v1294 = vadd.f32 %v1253, %v1293
  %v1295 = vpop.f32.mrf.mxu0
  %v1296 = vpop.f32.mrf.mxu0
  %1297 = vdwg.mxu0
  %v1298 = vmax.f32 %v1169, 0.0
  %v1299 = vmax.f32 %v1171, 0.0
  %v1300 = vmax.f32 %v1292, 0.0
  %v1301 = vmax.f32 %v1294, 0.0
  %v1302 = vpack.c.bf16 %v1298, %v1298
  %v1303 = vpack.c.bf16 %v1299, %v1299
  %v1304 = vpack.c.bf16 %v1300, %v1300
  %v1305 = vpack.c.bf16 %v1301, %v1301
  %v1306 = vld [vmem:[%s3] sm:$0xff]
  %v1307 = vld [vmem:[%s3 + $0x8] sm:$0xff]
  %v1308 = vld [vmem:[%s3 + $0x10] sm:$0xff]
  %v1309 = vld [vmem:[%s3 + $0x18] sm:$0xff]
  %v1310 = vld [vmem:[%s3 + $0x20] sm:$0xff]
  %v1311 = vld [vmem:[%s3 + $0x28] sm:$0xff]
  %v1312 = vld [vmem:[%s3 + $0x30] sm:$0xff]
  %v1313 = vld [vmem:[%s3 + $0x38] sm:$0xff]
  %v1314 = vld [vmem:[%s3 + $0x40] sm:$0xff]
  %v1315 = vld [vmem:[%s3 + $0x48] sm:$0xff]
  %v1316 = vld [vmem:[%s3 + $0x50] sm:$0xff]
  %v1317 = vld [vmem:[%s3 + $0x58] sm:$0xff]
  %v1318 = vld [vmem:[%s3 + $0x60] sm:$0xff]
  %v1319 = vld [vmem:[%s3 + $0x68] sm:$0xff]
  %v1320 = vld [vmem:[%s3 + $0x70] sm:$0xff]
  %v1321 = vld [vmem:[%s3 + $0x78] sm:$0xff]
  %v1322 = vld [vmem:[%s3 + $0x80] sm:$0xff]
  %v1323 = vld [vmem:[%s3 + $0x88] sm:$0xff]
  %v1324 = vld [vmem:[%s3 + $0x90] sm:$0xff]
  %v1325 = vld [vmem:[%s3 + $0x98] sm:$0xff]
  %v1326 = vld [vmem:[%s3 + $0xa0] sm:$0xff]
  %v1327 = vld [vmem:[%s3 + $0xa8] sm:$0xff]
  %v1328 = vld [vmem:[%s3 + $0xb0] sm:$0xff]
  %v1329 = vld [vmem:[%s3 + $0xb8] sm:$0xff]
  %v1330 = vld [vmem:[%s3 + $0xc0] sm:$0xff]
  %v1331 = vld [vmem:[%s3 + $0xc8] sm:$0xff]
  %v1332 = vld [vmem:[%s3 + $0xd0] sm:$0xff]
  %v1333 = vld [vmem:[%s3 + $0xd8] sm:$0xff]
  %v1334 = vld [vmem:[%s3 + $0xe0] sm:$0xff]
  %v1335 = vld [vmem:[%s3 + $0xe8] sm:$0xff]
  %v1336 = vld [vmem:[%s3 + $0xf0] sm:$0xff]
  %v1337 = vld [vmem:[%s3 + $0xf8] sm:$0xff]
  %v1338 = vld [vmem:[%s3 + $0x100] sm:$0xff]
  %v1339 = vld [vmem:[%s3 + $0x108] sm:$0xff]
  %v1340 = vld [vmem:[%s3 + $0x110] sm:$0xff]
  %v1341 = vld [vmem:[%s3 + $0x118] sm:$0xff]
  %v1342 = vld [vmem:[%s3 + $0x120] sm:$0xff]
  %v1343 = vld [vmem:[%s3 + $0x128] sm:$0xff]
  %v1344 = vld [vmem:[%s3 + $0x130] sm:$0xff]
  %v1345 = vld [vmem:[%s3 + $0x138] sm:$0xff]
  %v1346 = vld [vmem:[%s3 + $0x140] sm:$0xff]
  %v1347 = vld [vmem:[%s3 + $0x148] sm:$0xff]
  %v1348 = vld [vmem:[%s3 + $0x150] sm:$0xff]
  %v1349 = vld [vmem:[%s3 + $0x158] sm:$0xff]
  %v1350 = vld [vmem:[%s3 + $0x160] sm:$0xff]
  %v1351 = vld [vmem:[%s3 + $0x168] sm:$0xff]
  %v1352 = vld [vmem:[%s3 + $0x170] sm:$0xff]
  %v1353 = vld [vmem:[%s3 + $0x178] sm:$0xff]
  %v1354 = vld [vmem:[%s3 + $0x180] sm:$0xff]
  %v1355 = vld [vmem:[%s3 + $0x188] sm:$0xff]
  %v1356 = vld [vmem:[%s3 + $0x190] sm:$0xff]
  %v1357 = vld [vmem:[%s3 + $0x198] sm:$0xff]
  %v1358 = vld [vmem:[%s3 + $0x1a0] sm:$0xff]
  %v1359 = vld [vmem:[%s3 + $0x1a8] sm:$0xff]
  %v1360 = vld [vmem:[%s3 + $0x1b0] sm:$0xff]
  %v1361 = vld [vmem:[%s3 + $0x1b8] sm:$0xff]
  %v1362 = vld [vmem:[%s3 + $0x1c0] sm:$0xff]
  %v1363 = vld [vmem:[%s3 + $0x1c8] sm:$0xff]
  %v1364 = vld [vmem:[%s3 + $0x1d0] sm:$0xff]
  %v1365 = vld [vmem:[%s3 + $0x1d8] sm:$0xff]
  %v1366 = vld [vmem:[%s3 + $0x1e0] sm:$0xff]
  %v1367 = vld [vmem:[%s3 + $0x1e8] sm:$0xff]
  %v1368 = vld [vmem:[%s3 + $0x1f0] sm:$0xff]
  %v1369 = vld [vmem:[%s3 + $0x1f8] sm:$0xff]
  %v1370 = vld [vmem:[%s4] sm:$0x3]
  %v1372 = vlaneseq
  %v1373 = vshrl.u32 %v1372, 7
  %v1374 = vsub.s32 0, %v1373
  %v1375 = vrot.slane %v1370, %v1374
  %v1376 = vlaneseq
  %v1377 = vshrl.u32 %v1376, 7
  %v1378 = vsub.s32 1, %v1377
  %v1379 = vrot.slane %v1370, %v1378
  %v1446 = vunpack.c.l.b16 %v1306
  %v1447 = vunpack.c.h.b16 %v1306
  %v1448 = vunpack.c.l.b16 %v1307
  %v1449 = vunpack.c.h.b16 %v1307
  %v1450 = vunpack.c.l.b16 %v1308
  %v1451 = vunpack.c.h.b16 %v1308
  %v1452 = vunpack.c.l.b16 %v1309
  %v1453 = vunpack.c.h.b16 %v1309
  %v1454 = vunpack.c.l.b16 %v1310
  %v1455 = vunpack.c.h.b16 %v1310
  %v1456 = vunpack.c.l.b16 %v1311
  %v1457 = vunpack.c.h.b16 %v1311
  %v1458 = vunpack.c.l.b16 %v1312
  %v1459 = vunpack.c.h.b16 %v1312
  %v1460 = vunpack.c.l.b16 %v1313
  %v1461 = vunpack.c.h.b16 %v1313
  %v1462 = vunpack.c.l.b16 %v1314
  %v1463 = vunpack.c.h.b16 %v1314
  %v1464 = vunpack.c.l.b16 %v1315
  %v1465 = vunpack.c.h.b16 %v1315
  %v1466 = vunpack.c.l.b16 %v1316
  %v1467 = vunpack.c.h.b16 %v1316
  %v1468 = vunpack.c.l.b16 %v1317
  %v1469 = vunpack.c.h.b16 %v1317
  %v1470 = vunpack.c.l.b16 %v1318
  %v1471 = vunpack.c.h.b16 %v1318
  %v1472 = vunpack.c.l.b16 %v1319
  %v1473 = vunpack.c.h.b16 %v1319
  %v1474 = vunpack.c.l.b16 %v1320
  %v1475 = vunpack.c.h.b16 %v1320
  %v1476 = vunpack.c.l.b16 %v1321
  %v1477 = vunpack.c.h.b16 %v1321
  %v1478 = vunpack.c.l.b16 %v1322
  %v1479 = vunpack.c.h.b16 %v1322
  %v1480 = vunpack.c.l.b16 %v1323
  %v1481 = vunpack.c.h.b16 %v1323
  %v1482 = vunpack.c.l.b16 %v1324
  %v1483 = vunpack.c.h.b16 %v1324
  %v1484 = vunpack.c.l.b16 %v1325
  %v1485 = vunpack.c.h.b16 %v1325
  %v1486 = vunpack.c.l.b16 %v1326
  %v1487 = vunpack.c.h.b16 %v1326
  %v1488 = vunpack.c.l.b16 %v1327
  %v1489 = vunpack.c.h.b16 %v1327
  %v1490 = vunpack.c.l.b16 %v1328
  %v1491 = vunpack.c.h.b16 %v1328
  %v1492 = vunpack.c.l.b16 %v1329
  %v1493 = vunpack.c.h.b16 %v1329
  %v1494 = vunpack.c.l.b16 %v1330
  %v1495 = vunpack.c.h.b16 %v1330
  %v1496 = vunpack.c.l.b16 %v1331
  %v1497 = vunpack.c.h.b16 %v1331
  %v1498 = vunpack.c.l.b16 %v1332
  %v1499 = vunpack.c.h.b16 %v1332
  %v1500 = vunpack.c.l.b16 %v1333
  %v1501 = vunpack.c.h.b16 %v1333
  %v1502 = vunpack.c.l.b16 %v1334
  %v1503 = vunpack.c.h.b16 %v1334
  %v1504 = vunpack.c.l.b16 %v1335
  %v1505 = vunpack.c.h.b16 %v1335
  %v1506 = vunpack.c.l.b16 %v1336
  %v1507 = vunpack.c.h.b16 %v1336
  %v1508 = vunpack.c.l.b16 %v1337
  %v1509 = vunpack.c.h.b16 %v1337
  %v1510 = vunpack.c.l.b16 %v1338
  %v1511 = vunpack.c.h.b16 %v1338
  %v1512 = vunpack.c.l.b16 %v1339
  %v1513 = vunpack.c.h.b16 %v1339
  %v1514 = vunpack.c.l.b16 %v1340
  %v1515 = vunpack.c.h.b16 %v1340
  %v1516 = vunpack.c.l.b16 %v1341
  %v1517 = vunpack.c.h.b16 %v1341
  %v1518 = vunpack.c.l.b16 %v1342
  %v1519 = vunpack.c.h.b16 %v1342
  %v1520 = vunpack.c.l.b16 %v1343
  %v1521 = vunpack.c.h.b16 %v1343
  %v1522 = vunpack.c.l.b16 %v1344
  %v1523 = vunpack.c.h.b16 %v1344
  %v1524 = vunpack.c.l.b16 %v1345
  %v1525 = vunpack.c.h.b16 %v1345
  %v1526 = vunpack.c.l.b16 %v1346
  %v1527 = vunpack.c.h.b16 %v1346
  %v1528 = vunpack.c.l.b16 %v1347
  %v1529 = vunpack.c.h.b16 %v1347
  %v1530 = vunpack.c.l.b16 %v1348
  %v1531 = vunpack.c.h.b16 %v1348
  %v1532 = vunpack.c.l.b16 %v1349
  %v1533 = vunpack.c.h.b16 %v1349
  %v1534 = vunpack.c.l.b16 %v1350
  %v1535 = vunpack.c.h.b16 %v1350
  %v1536 = vunpack.c.l.b16 %v1351
  %v1537 = vunpack.c.h.b16 %v1351
  %v1538 = vunpack.c.l.b16 %v1352
  %v1539 = vunpack.c.h.b16 %v1352
  %v1540 = vunpack.c.l.b16 %v1353
  %v1541 = vunpack.c.h.b16 %v1353
  %v1542 = vunpack.c.l.b16 %v1354
  %v1543 = vunpack.c.h.b16 %v1354
  %v1544 = vunpack.c.l.b16 %v1355
  %v1545 = vunpack.c.h.b16 %v1355
  %v1546 = vunpack.c.l.b16 %v1356
  %v1547 = vunpack.c.h.b16 %v1356
  %v1548 = vunpack.c.l.b16 %v1357
  %v1549 = vunpack.c.h.b16 %v1357
  %v1550 = vunpack.c.l.b16 %v1358
  %v1551 = vunpack.c.h.b16 %v1358
  %v1552 = vunpack.c.l.b16 %v1359
  %v1553 = vunpack.c.h.b16 %v1359
  %v1554 = vunpack.c.l.b16 %v1360
  %v1555 = vunpack.c.h.b16 %v1360
  %v1556 = vunpack.c.l.b16 %v1361
  %v1557 = vunpack.c.h.b16 %v1361
  %v1558 = vunpack.c.l.b16 %v1362
  %v1559 = vunpack.c.h.b16 %v1362
  %v1560 = vunpack.c.l.b16 %v1363
  %v1561 = vunpack.c.h.b16 %v1363
  %v1562 = vunpack.c.l.b16 %v1364
  %v1563 = vunpack.c.h.b16 %v1364
  %v1564 = vunpack.c.l.b16 %v1365
  %v1565 = vunpack.c.h.b16 %v1365
  %v1566 = vunpack.c.l.b16 %v1366
  %v1567 = vunpack.c.h.b16 %v1366
  %v1568 = vunpack.c.l.b16 %v1367
  %v1569 = vunpack.c.h.b16 %v1367
  %v1570 = vunpack.c.l.b16 %v1368
  %v1571 = vunpack.c.h.b16 %v1368
  %v1572 = vunpack.c.l.b16 %v1369
  %v1573 = vunpack.c.h.b16 %v1369
  %v1574 = vpack.c.b16 %v1448, %v1446
  %v1575 = vpack.c.b16 %v1449, %v1447
  %v1576 = vpack.c.b16 %v1452, %v1450
  %v1577 = vpack.c.b16 %v1453, %v1451
  %v1578 = vpack.c.b16 %v1456, %v1454
  %v1579 = vpack.c.b16 %v1457, %v1455
  %v1580 = vpack.c.b16 %v1460, %v1458
  %v1581 = vpack.c.b16 %v1461, %v1459
  %v1582 = vpack.c.b16 %v1464, %v1462
  %v1583 = vpack.c.b16 %v1465, %v1463
  %v1584 = vpack.c.b16 %v1468, %v1466
  %v1585 = vpack.c.b16 %v1469, %v1467
  %v1586 = vpack.c.b16 %v1472, %v1470
  %v1587 = vpack.c.b16 %v1473, %v1471
  %v1588 = vpack.c.b16 %v1476, %v1474
  %v1589 = vpack.c.b16 %v1477, %v1475
  %v1590 = vpack.c.b16 %v1480, %v1478
  %v1591 = vpack.c.b16 %v1481, %v1479
  %v1592 = vpack.c.b16 %v1484, %v1482
  %v1593 = vpack.c.b16 %v1485, %v1483
  %v1594 = vpack.c.b16 %v1488, %v1486
  %v1595 = vpack.c.b16 %v1489, %v1487
  %v1596 = vpack.c.b16 %v1492, %v1490
  %v1597 = vpack.c.b16 %v1493, %v1491
  %v1598 = vpack.c.b16 %v1496, %v1494
  %v1599 = vpack.c.b16 %v1497, %v1495
  %v1600 = vpack.c.b16 %v1500, %v1498
  %v1601 = vpack.c.b16 %v1501, %v1499
  %v1602 = vpack.c.b16 %v1504, %v1502
  %v1603 = vpack.c.b16 %v1505, %v1503
  %v1604 = vpack.c.b16 %v1508, %v1506
  %v1605 = vpack.c.b16 %v1509, %v1507
  %v1606 = vpack.c.b16 %v1512, %v1510
  %v1607 = vpack.c.b16 %v1513, %v1511
  %v1608 = vpack.c.b16 %v1516, %v1514
  %v1609 = vpack.c.b16 %v1517, %v1515
  %v1610 = vpack.c.b16 %v1520, %v1518
  %v1611 = vpack.c.b16 %v1521, %v1519
  %v1612 = vpack.c.b16 %v1524, %v1522
  %v1613 = vpack.c.b16 %v1525, %v1523
  %v1614 = vpack.c.b16 %v1528, %v1526
  %v1615 = vpack.c.b16 %v1529, %v1527
  %v1616 = vpack.c.b16 %v1532, %v1530
  %v1617 = vpack.c.b16 %v1533, %v1531
  %v1618 = vpack.c.b16 %v1536, %v1534
  %v1619 = vpack.c.b16 %v1537, %v1535
  %v1620 = vpack.c.b16 %v1540, %v1538
  %v1621 = vpack.c.b16 %v1541, %v1539
  %v1622 = vpack.c.b16 %v1544, %v1542
  %v1623 = vpack.c.b16 %v1545, %v1543
  %v1624 = vpack.c.b16 %v1548, %v1546
  %v1625 = vpack.c.b16 %v1549, %v1547
  %v1626 = vpack.c.b16 %v1552, %v1550
  %v1627 = vpack.c.b16 %v1553, %v1551
  %v1628 = vpack.c.b16 %v1556, %v1554
  %v1629 = vpack.c.b16 %v1557, %v1555
  %v1630 = vpack.c.b16 %v1560, %v1558
  %v1631 = vpack.c.b16 %v1561, %v1559
  %v1632 = vpack.c.b16 %v1564, %v1562
  %v1633 = vpack.c.b16 %v1565, %v1563
  %v1634 = vpack.c.b16 %v1568, %v1566
  %v1635 = vpack.c.b16 %v1569, %v1567
  %v1636 = vpack.c.b16 %v1572, %v1570
  %v1637 = vpack.c.b16 %v1573, %v1571
  %1702 = vmatprep.subr.bf16.mxu0 %v1589
  %1703 = vmatpush1.bf16.msra.mxu0 %v1588
  %1704 = vmatprep.subr.bf16.mxu0 %v1587
  %1705 = vmatpush1.bf16.msra.mxu0 %v1586
  %1706 = vmatprep.subr.bf16.mxu0 %v1585
  %1707 = vmatpush1.bf16.msra.mxu0 %v1584
  %1708 = vmatprep.subr.bf16.mxu0 %v1583
  %1709 = vmatpush1.bf16.msra.mxu0 %v1582
  %1710 = vmatprep.subr.bf16.mxu0 %v1581
  %1711 = vmatpush1.bf16.msra.mxu0 %v1580
  %1712 = vmatprep.subr.bf16.mxu0 %v1579
  %1713 = vmatpush1.bf16.msra.mxu0 %v1578
  %1714 = vmatprep.subr.bf16.mxu0 %v1577
  %1715 = vmatpush1.bf16.msra.mxu0 %v1576
  %1716 = vmatprep.subr.bf16.mxu0 %v1575
  %1717 = vmatpush1.bf16.msra.mxu0 %v1574
  %1718 = vmatprep.subr.bf16.mxu0 %v1605
  %1719 = vmatpush2.bf16.msra.mxu0 %v1604
  %1720 = vmatprep.subr.bf16.mxu0 %v1603
  %1721 = vmatpush2.bf16.msra.mxu0 %v1602
  %1722 = vmatprep.subr.bf16.mxu0 %v1601
  %1723 = vmatpush2.bf16.msra.mxu0 %v1600
  %1724 = vmatprep.subr.bf16.mxu0 %v1599
  %1725 = vmatpush2.bf16.msra.mxu0 %v1598
  %1726 = vmatprep.subr.bf16.mxu0 %v1597
  %1727 = vmatpush2.bf16.msra.mxu0 %v1596
  %1728 = vmatprep.subr.bf16.mxu0 %v1595
  %1729 = vmatpush2.bf16.msra.mxu0 %v1594
  %1730 = vmatprep.subr.bf16.mxu0 %v1593
  %1731 = vmatpush2.bf16.msra.mxu0 %v1592
  %1732 = vmatprep.subr.bf16.mxu0 %v1591
  %1733 = vmatpush2.bf16.msra.mxu0 %v1590
  %1734 = vmatprep.mubr.bf16.mxu0 %v1303
  %1735 = vmatmul.mubr.bf16.gmra.mxu0 %v1302
  %v1736 = vpop.f32.mrf.mxu0
  %v1737 = vadd.f32 %v1375, %v1736
  %v1738 = vpop.f32.mrf.mxu0
  %v1739 = vadd.f32 %v1379, %v1738
  %v1740 = vpop.f32.mrf.mxu0
  %v1741 = vpop.f32.mrf.mxu0
  %1742 = vdwg.mxu0
  %1743 = vmatprep.subr.bf16.mxu0 %v1621
  %1744 = vmatpush1.bf16.msra.mxu0 %v1620
  %1745 = vmatprep.subr.bf16.mxu0 %v1619
  %1746 = vmatpush1.bf16.msra.mxu0 %v1618
  %1747 = vmatprep.subr.bf16.mxu0 %v1617
  %1748 = vmatpush1.bf16.msra.mxu0 %v1616
  %1749 = vmatprep.subr.bf16.mxu0 %v1615
  %1750 = vmatpush1.bf16.msra.mxu0 %v1614
  %1751 = vmatprep.subr.bf16.mxu0 %v1613
  %1752 = vmatpush1.bf16.msra.mxu0 %v1612
  %1753 = vmatprep.subr.bf16.mxu0 %v1611
  %1754 = vmatpush1.bf16.msra.mxu0 %v1610
  %1755 = vmatprep.subr.bf16.mxu0 %v1609
  %1756 = vmatpush1.bf16.msra.mxu0 %v1608
  %1757 = vmatprep.subr.bf16.mxu0 %v1607
  %1758 = vmatpush1.bf16.msra.mxu0 %v1606
  %1759 = vmatprep.subr.bf16.mxu0 %v1637
  %1760 = vmatpush2.bf16.msra.mxu0 %v1636
  %1761 = vmatprep.subr.bf16.mxu0 %v1635
  %1762 = vmatpush2.bf16.msra.mxu0 %v1634
  %1763 = vmatprep.subr.bf16.mxu0 %v1633
  %1764 = vmatpush2.bf16.msra.mxu0 %v1632
  %1765 = vmatprep.subr.bf16.mxu0 %v1631
  %1766 = vmatpush2.bf16.msra.mxu0 %v1630
  %1767 = vmatprep.subr.bf16.mxu0 %v1629
  %1768 = vmatpush2.bf16.msra.mxu0 %v1628
  %1769 = vmatprep.subr.bf16.mxu0 %v1627
  %1770 = vmatpush2.bf16.msra.mxu0 %v1626
  %1771 = vmatprep.subr.bf16.mxu0 %v1625
  %1772 = vmatpush2.bf16.msra.mxu0 %v1624
  %1773 = vmatprep.subr.bf16.mxu0 %v1623
  %1774 = vmatpush2.bf16.msra.mxu0 %v1622
  %1775 = vmatprep.mubr.bf16.mxu0 %v1305
  %1776 = vmatmul.mubr.bf16.gmra.mxu0 %v1304
  %v1777 = vpop.f32.mrf.mxu0
  %v1778 = vadd.f32 %v1737, %v1777
  %v1779 = vpop.f32.mrf.mxu0
  %v1780 = vadd.f32 %v1739, %v1779
  %v1781 = vpop.f32.mrf.mxu0
  %v1782 = vpop.f32.mrf.mxu0
  %1783 = vdwg.mxu0
  %v1784 = vmax.f32 %v1778, 0.0
  %v1785 = vmax.f32 %v1780, 0.0
  %v1786 = vld [vmem:[%s5] sm:$0x3]
  %v1788 = vlaneseq
  %v1789 = vshrl.u32 %v1788, 7
  %v1790 = vsub.s32 0, %v1789
  %v1791 = vrot.slane %v1786, %v1790
  %v1792 = vlaneseq
  %v1793 = vshrl.u32 %v1792, 7
  %v1794 = vsub.s32 1, %v1793
  %v1795 = vrot.slane %v1786, %v1794
  %v1798 = vmul.f32 %v1784, %v1791
  %v1799 = vmul.f32 %v1785, %v1795
  %v1800 = vadd.f32 %v1798, %v1799
  %1801 = vadd.xlane.f32.xlu0 %v1800
  %v1802 = vpop.xlane.xlu0 %1801
  %v1803 = vld [vmem:[#allocation2] sm:$0x1]
  %v1805 = vlaneseq
  %v1806 = vshrl.u32 %v1805, 7
  %v1807 = vsub.s32 0, %v1806
  %v1808 = vrot.slane %v1803, %v1807
  %v1810 = vadd.f32 %v1802, %v1808
  %v1811 = vmax.f32 %v1810, 0.0
  %v1812 = vxor.u32 %v1811, 2147483648
  %v1813 = vmul.f32 %v1812, 1.442695
  %v1814 = vpow.pop %v1813
  %v1815 = vadd.f32 %v1814, 1.0
  %v1816 = vrcp.pop %v1815
  %v1817 = vmul.f32 1.0, %v1816
  %vm1818 = vcmask 7168
  %1819 = vst.msk [vmem:[%s7] sm:$0xff] %vm1818, %v1817
  // Predicated region
  $region30: #{mlp_forward.1} parent=0 // pred_check
    _
  $region31: #{mlp_forward.1} parent=0 // pred_check_branch
    %1821 = sbr.rel (0) target = $region33
  $region32: #{mlp_forward.1} parent=0 // pred_region
    _
  $region33: #{mlp_forward.1} parent=0 // pred_fallthru
    _
  // Predicated region
  $region34: #{mlp_forward.1} parent=0 // pred_check
    _
  $region35: #{mlp_forward.1} parent=0 // pred_check_branch
    %1823 = sbr.rel (0) target = $region37
  $region36: #{mlp_forward.1} parent=0 // pred_region
    _
  $region37: #{mlp_forward.1} parent=0 // pred_fallthru
    _

</llo_original>
